<compile_context>
chip_gen: v7x
topology: tpu7x:2x2x1
jax: 0.10.0
libtpu: 0.0.40
codegen_flags: <defaults>
</compile_context>

<pallas_src>
import jax
import jax.numpy as jnp
from jax.experimental import pallas as pl
from jax.experimental.pallas import tpu as pltpu


_EPS = 1e-5
_LANE = 128


def _bn_train(h, gamma, beta):
    """Training-mode BatchNorm1d over the batch axis (axis 0), biased variance.

    One-traversal statistics: sum(h) and sum(h*h) are issued back-to-back so
    the two XLU reductions can overlap instead of serializing behind a mean
    subtraction.  var = E[h^2] - mu^2 (clamped at 0) is numerically fine for
    BN-scale activations in f32.
    """
    inv_n = 1.0 / h.shape[0]
    s1 = jnp.sum(h, axis=0, keepdims=True)
    s2 = jnp.sum(h * h, axis=0, keepdims=True)
    mu = s1 * inv_n
    var = jnp.maximum(s2 * inv_n - mu * mu, 0.0)
    return (h - mu) * jax.lax.rsqrt(var + _EPS) * gamma + beta


def _neuralnet_kernel(x_ref, bn0_ref, bnh_ref, bn4_ref,
                      w1_ref, w2_ref, w3_ref, w4_ref, o_ref, acc_ref):
    k = pl.program_id(0)
    nk = pl.num_programs(0)

    @pl.when(k == 0)
    def _():
        acc_ref[...] = jnp.zeros_like(acc_ref)

    # ---- layer1 (streamed over the In axis): BN(input chunk) -> chunk matmul
    # Per-feature BN stats over the batch => per-chunk normalization is exact.
    # (Linear biases omitted everywhere: cancelled by the following BN's mean
    #  subtraction in train mode.)
    x = x_ref[...]                      # (B, tk)   f32
    bn0 = bn0_ref[...]                  # (2, tk)   rows: [gamma, beta]
    h = _bn_train(x, bn0[0:1, :], bn0[1:2, :])
    acc_ref[...] += jnp.dot(h.astype(jnp.bfloat16), w1_ref[...],
                            preferred_element_type=jnp.float32)

    @pl.when(k == nk - 1)
    def _():
        bnh = bnh_ref[...]              # (6, H)    rows: [g1,b1,g2,b2,g3,b3]
        bn4 = bn4_ref[...]              # (2, C_pad)

        # ---- layer1 tail: BN -> ReLU ----
        h1 = jnp.maximum(_bn_train(acc_ref[...], bnh[0:1, :], bnh[1:2, :]), 0.0)

        # ---- layer2: Linear -> BN -> ReLU ----
        h2 = jnp.dot(h1.astype(jnp.bfloat16), w2_ref[...],
                     preferred_element_type=jnp.float32)
        h2 = jnp.maximum(_bn_train(h2, bnh[2:3, :], bnh[3:4, :]), 0.0)

        # ---- layer3: Linear -> BN -> ReLU ----
        h3 = jnp.dot(h2.astype(jnp.bfloat16), w3_ref[...],
                     preferred_element_type=jnp.float32)
        h3 = jnp.maximum(_bn_train(h3, bnh[4:5, :], bnh[5:6, :]), 0.0)

        # ---- layer4: Linear -> BN (lane-padded classes; padded cols stay 0
        #      since w4 pad = 0, gamma pad = 1, beta pad = 0 -> d = 0) ----
        h4 = jnp.dot(h3.astype(jnp.bfloat16), w4_ref[...],
                     preferred_element_type=jnp.float32)
        h4 = _bn_train(h4, bn4[0:1, :], bn4[1:2, :])

        o_ref[...] = h4.astype(o_ref.dtype)


def prepare_params(params):
    """One-time parameter packing.  Call once and reuse the result: rebuilding
    these arrays per forward call adds ~8 HLO copies whose HBM traffic is
    comparable to the kernel's own input DMA."""
    H = params["w1"].shape[1]
    C = params["w4"].shape[1]
    C_pad = ((C + _LANE - 1) // _LANE) * _LANE

    # bf16 weights for MXU peak rate; f32 accumulation happens in the kernel.
    w1 = params["w1"].astype(jnp.bfloat16)
    w2 = params["w2"].astype(jnp.bfloat16)
    w3 = params["w3"].astype(jnp.bfloat16)
    w4 = jnp.zeros((H, C_pad), jnp.bfloat16).at[:, :C].set(
        params["w4"].astype(jnp.bfloat16))

    # Pack the 10 tiny (1, F) BN vectors into 3 small arrays (fewer kernel
    # inputs -> less per-input DMA/descriptor overhead).
    bn0 = jnp.concatenate([params["bn0_g"], params["bn0_b"]], axis=0)   # (2, In)
    bnh = jnp.concatenate([params["bn1_g"], params["bn1_b"],
                           params["bn2_g"], params["bn2_b"],
                           params["bn3_g"], params["bn3_b"]], axis=0)   # (6, H)
    bn4_g = jnp.ones((1, C_pad), jnp.float32).at[:, :C].set(params["bn4_g"])
    bn4_b = jnp.zeros((1, C_pad), jnp.float32).at[:, :C].set(params["bn4_b"])
    bn4 = jnp.concatenate([bn4_g, bn4_b], axis=0)                        # (2, C_pad)

    packed = dict(bn0=bn0, bnh=bnh, bn4=bn4, w1=w1, w2=w2, w3=w3, w4=w4,
                  num_classes=C)
    return jax.tree_util.tree_map(
        lambda a: jax.device_put(a) if hasattr(a, "dtype") else a, packed)


def _pick_in_chunk(In, target):
    """Largest multiple of 128 dividing In, capped at `target` (else whole In)."""
    if In <= target or In % 128 != 0:
        return In
    best = In
    for cand in range(128, target + 1, 128):
        if In % cand == 0:
            best = cand
    return best


def neuralnet_forward(x, packed, *, in_chunk=2048):
    """x: [B, input_size] float32.  packed: output of prepare_params()."""
    B, In = x.shape
    H = packed["w2"].shape[0]
    C = packed["num_classes"]
    C_pad = packed["w4"].shape[1]

    bn0, bnh, bn4 = packed["bn0"], packed["bnh"], packed["bn4"]
    w1, w2, w3, w4 = packed["w1"], packed["w2"], packed["w3"], packed["w4"]

    tk = _pick_in_chunk(In, in_chunk)
    nk = In // tk

    # ---- VMEM budget: actual live buffers + 2 MiB headroom, capped for v7x ----
    nbytes = lambda a: int(a.size) * a.dtype.itemsize
    resident = sum(nbytes(a) for a in (bnh, bn4, w2, w3, w4))
    streamed = 2 * (B * tk * 4 + 2 * tk * 4 + tk * H * 2)   # double-buffered x/bn0/w1
    out_bytes = B * C_pad * 4
    acc_bytes = B * H * 4
    act_bytes = B * max(tk, H, C_pad) * 4 + B * max(tk, H) * 2
    vmem_bytes = resident + streamed + out_bytes + acc_bytes + act_bytes + (2 << 20)
    vmem_limit = int(min(max(vmem_bytes, 16 << 20), 48 << 20))

    in_bytes = nbytes(x) + sum(nbytes(a) for a in (bn0, bnh, bn4, w1, w2, w3, w4))
    flops = 2 * B * (In * H + 2 * H * H + H * C_pad)
    transcendentals = In + 3 * H + C_pad        # one rsqrt per BN feature

    grid_spec = pltpu.PrefetchScalarGridSpec(
        num_scalar_prefetch=0,
        grid=(nk,),
        in_specs=[
            pl.BlockSpec((B, tk), lambda k: (0, k)),        # x       (streamed)
            pl.BlockSpec((2, tk), lambda k: (0, k)),        # bn0     (streamed)
            pl.BlockSpec((6, H), lambda k: (0, 0)),         # bnh     (resident)
            pl.BlockSpec((2, C_pad), lambda k: (0, 0)),     # bn4     (resident)
            pl.BlockSpec((tk, H), lambda k: (k, 0)),        # w1      (streamed)
            pl.BlockSpec((H, H), lambda k: (0, 0)),         # w2      (resident)
            pl.BlockSpec((H, H), lambda k: (0, 0)),         # w3      (resident)
            pl.BlockSpec((H, C_pad), lambda k: (0, 0)),     # w4      (resident)
        ],
        out_specs=pl.BlockSpec((B, C_pad), lambda k: (0, 0)),
        scratch_shapes=[pltpu.VMEM((B, H), jnp.float32)],   # layer1 accumulator
    )

    out_padded = pl.pallas_call(
        _neuralnet_kernel,
        out_shape=jax.ShapeDtypeStruct((B, C_pad), jnp.float32),
        grid_spec=grid_spec,
        compiler_params=pltpu.CompilerParams(
            dimension_semantics=("arbitrary",),             # In axis is a reduction
            vmem_limit_bytes=vmem_limit),
        cost_estimate=pl.CostEstimate(
            flops=flops,
            transcendentals=transcendentals,
            bytes_accessed=in_bytes + out_bytes),
    )(x, bn0, bnh, bn4, w1, w2, w3, w4)

    return out_padded[:, :C]


def init_params(key, input_size, hidden_size, num_classes):
    """Deterministic synthetic parameters (shapes match nn.Module __init__)."""
    ks = jax.random.split(key, 18)

    def lin(kw, kb, fan_in, fan_out):
        bound = 1.0 / jnp.sqrt(fan_in)
        w = jax.random.uniform(kw, (fan_in, fan_out), jnp.float32, -bound, bound)
        b = jax.random.uniform(kb, (1, fan_out), jnp.float32, -bound, bound)
        return w, b

    w1, b1 = lin(ks[0], ks[1], input_size, hidden_size)
    w2, b2 = lin(ks[2], ks[3], hidden_size, hidden_size)
    w3, b3 = lin(ks[4], ks[5], hidden_size, hidden_size)
    w4, b4 = lin(ks[6], ks[7], hidden_size, num_classes)

    def bn(kg, kb, feat):
        g = 1.0 + 0.1 * jax.random.normal(kg, (1, feat), jnp.float32)
        b = 0.1 * jax.random.normal(kb, (1, feat), jnp.float32)
        return g, b

    bn0_g, bn0_b = bn(ks[8], ks[9], input_size)
    bn1_g, bn1_b = bn(ks[10], ks[11], hidden_size)
    bn2_g, bn2_b = bn(ks[12], ks[13], hidden_size)
    bn3_g, bn3_b = bn(ks[14], ks[15], hidden_size)
    bn4_g, bn4_b = bn(ks[16], ks[17], num_classes)

    return dict(
        bn0_g=bn0_g, bn0_b=bn0_b,
        w1=w1, b1=b1, bn1_g=bn1_g, bn1_b=bn1_b,
        w2=w2, b2=b2, bn2_g=bn2_g, bn2_b=bn2_b,
        w3=w3, b3=b3, bn3_g=bn3_g, bn3_b=bn3_b,
        w4=w4, b4=b4, bn4_g=bn4_g, bn4_b=bn4_b,
    )


def _reference_forward_f32(x, p):
    """Pure-JAX f32 reference mirroring the PyTorch forward exactly (with biases)."""
    def bn(h, g, b):
        mu = jnp.mean(h, axis=0, keepdims=True)
        var = jnp.mean((h - mu) ** 2, axis=0, keepdims=True)
        return (h - mu) / jnp.sqrt(var + _EPS) * g + b

    h = bn(x, p["bn0_g"], p["bn0_b"])
    h = jnp.maximum(bn(h @ p["w1"] + p["b1"], p["bn1_g"], p["bn1_b"]), 0.0)
    h = jnp.maximum(bn(h @ p["w2"] + p["b2"], p["bn2_g"], p["bn2_b"]), 0.0)
    h = jnp.maximum(bn(h @ p["w3"] + p["b3"], p["bn3_g"], p["bn3_b"]), 0.0)
    h = bn(h @ p["w4"] + p["b4"], p["bn4_g"], p["bn4_b"])
    return h


def _reference_forward_kernel_math(x, p):
    """Pure-JAX reference of the exact math the kernel performs
    (one-pass BN stats, bf16 matmul operands, f32 accumulate, biases dropped)."""
    def dot_bf16(h, w):
        return jnp.dot(h.astype(jnp.bfloat16), w.astype(jnp.bfloat16),
                       preferred_element_type=jnp.float32)

    h = _bn_train(x, p["bn0_g"], p["bn0_b"])
    h = jnp.maximum(_bn_train(dot_bf16(h, p["w1"]), p["bn1_g"], p["bn1_b"]), 0.0)
    h = jnp.maximum(_bn_train(dot_bf16(h, p["w2"]), p["bn2_g"], p["bn2_b"]), 0.0)
    h = jnp.maximum(_bn_train(dot_bf16(h, p["w3"]), p["bn3_g"], p["bn3_b"]), 0.0)
    h = _bn_train(dot_bf16(h, p["w4"]), p["bn4_g"], p["bn4_b"])
    return h


if __name__ == "__main__":
    # Small shapes consistent with the module (input_size scaled down from 2*5000).
    batch, input_size, hidden_size, num_classes = 8, 256, 128, 17

    key = jax.random.PRNGKey(0)
    k_x, k_p = jax.random.split(key)
    x = jax.random.normal(k_x, (batch, input_size), jnp.float32)
    params = init_params(k_p, input_size, hidden_size, num_classes)

    # One-time packing (cached across forward calls).
    packed = jax.block_until_ready(prepare_params(params))

    # in_chunk=128 exercises the multi-step In-axis grid (nk=2) at demo shapes.
    out = jax.block_until_ready(neuralnet_forward(x, packed, in_chunk=128))
    assert out.shape == (batch, num_classes), out.shape

    # Tight check: kernel reproduces its intended math (bf16 dots, f32 one-pass BN).
    ref_k = _reference_forward_kernel_math(x, params)
    err_k = float(jnp.max(jnp.abs(out - ref_k)))
    assert jnp.allclose(out, ref_k, atol=2e-3, rtol=2e-3), err_k

    # Sanity check: matches the full-f32 PyTorch-semantics forward (bias drop is
    # exact in train-mode BN; remaining gap is bf16 rounding of matmul operands).
    ref_f = _reference_forward_f32(x, params)
    err_f = float(jnp.max(jnp.abs(out - ref_f)))
    assert err_f < 0.25, err_f

    print("KERNEL_OK")
</pallas_src>

<mosaic_0001>
module attributes {stable_mosaic.version = 11 : i64} {
  func.func @_neuralnet_kernel(%arg0: i32, %arg1: memref<8x128xf32, #tpu.memory_space<vmem>>, %arg2: memref<2x128xf32, #tpu.memory_space<vmem>>, %arg3: memref<6x128xf32, #tpu.memory_space<vmem>>, %arg4: memref<2x128xf32, #tpu.memory_space<vmem>>, %arg5: memref<128x128xbf16, #tpu.memory_space<vmem>>, %arg6: memref<128x128xbf16, #tpu.memory_space<vmem>>, %arg7: memref<128x128xbf16, #tpu.memory_space<vmem>>, %arg8: memref<128x128xbf16, #tpu.memory_space<vmem>>, %arg9: memref<8x128xf32, #tpu.memory_space<vmem>>, %arg10: memref<8x128xf32, #tpu.memory_space<vmem>>) attributes {dimension_semantics = [#tpu.dimension_semantics<arbitrary>], iteration_bounds = array<i64: 2>, scalar_prefetch = 0 : i64, scratch_operands = 1 : i64, tpu.core_type = #tpu.core_type<tc>, window_params = [{transform_indices = @transform_0, window_bounds = array<i64: 8, 128>}, {transform_indices = @transform_1, window_bounds = array<i64: 2, 128>}, {pipeline_mode = #tpu.pipeline_mode<synchronous>, transform_indices = @transform_2, window_bounds = array<i64: 6, 128>}, {pipeline_mode = #tpu.pipeline_mode<synchronous>, transform_indices = @transform_3, window_bounds = array<i64: 2, 128>}, {transform_indices = @transform_4, window_bounds = array<i64: 128, 128>}, {pipeline_mode = #tpu.pipeline_mode<synchronous>, transform_indices = @transform_5, window_bounds = array<i64: 128, 128>}, {pipeline_mode = #tpu.pipeline_mode<synchronous>, transform_indices = @transform_6, window_bounds = array<i64: 128, 128>}, {pipeline_mode = #tpu.pipeline_mode<synchronous>, transform_indices = @transform_7, window_bounds = array<i64: 128, 128>}, {pipeline_mode = #tpu.pipeline_mode<synchronous>, transform_indices = @transform_8, window_bounds = array<i64: 8, 128>}]} {
    %c0_i32 = arith.constant 0 : i32
    %0 = arith.cmpi eq, %arg0, %c0_i32 : i32
    %1 = arith.extui %0 : i1 to i32
    %c0_i32_0 = arith.constant 0 : i32
    %2 = arith.cmpi ne, %1, %c0_i32_0 : i32
    scf.if %2 {
      %cst_17 = arith.constant 0.000000e+00 : f32
      %40 = vector.broadcast %cst_17 : f32 to vector<8x128xf32>
      %c0_18 = arith.constant 0 : index
      %c0_19 = arith.constant 0 : index
      %41 = vector.load %arg10[%c0_18, %c0_19] : memref<8x128xf32, #tpu.memory_space<vmem>>, vector<8x128xf32>
      tpu.vector_store %arg10[%c0_18, %c0_19], %40 {strides = array<i32>} : memref<8x128xf32, #tpu.memory_space<vmem>>, vector<8x128xf32>,
    } else {
    }
    %c0 = arith.constant 0 : index
    %c0_1 = arith.constant 0 : index
    %3 = vector.load %arg1[%c0, %c0_1] : memref<8x128xf32, #tpu.memory_space<vmem>>, vector<8x128xf32>
    %c0_2 = arith.constant 0 : index
    %c0_3 = arith.constant 0 : index
    %4 = vector.load %arg2[%c0_2, %c0_3] : memref<2x128xf32, #tpu.memory_space<vmem>>, vector<2x128xf32>
    %5 = vector.extract_strided_slice %4 {offsets = [0, 0], sizes = [1, 128], strides = [1, 1]} : vector<2x128xf32> to vector<1x128xf32>
    %6 = vector.extract_strided_slice %4 {offsets = [1, 0], sizes = [1, 128], strides = [1, 1]} : vector<2x128xf32> to vector<1x128xf32>
    %cst = arith.constant dense<0.000000e+00> : vector<128xf32>
    %7 = vector.multi_reduction <add>, %3, %cst [0] : vector<8x128xf32> to vector<128xf32>
    %8 = vector.shape_cast %7 : vector<128xf32> to vector<1x128xf32>
    %9 = arith.mulf %3, %3 : vector<8x128xf32>
    %cst_4 = arith.constant dense<0.000000e+00> : vector<128xf32>
    %10 = vector.multi_reduction <add>, %9, %cst_4 [0] : vector<8x128xf32> to vector<128xf32>
    %11 = vector.shape_cast %10 : vector<128xf32> to vector<1x128xf32>
    %cst_5 = arith.constant 1.250000e-01 : f32
    %12 = vector.broadcast %cst_5 : f32 to vector<1x128xf32>
    %13 = arith.mulf %8, %12 : vector<1x128xf32>
    %cst_6 = arith.constant 1.250000e-01 : f32
    %14 = vector.broadcast %cst_6 : f32 to vector<1x128xf32>
    %15 = arith.mulf %11, %14 : vector<1x128xf32>
    %16 = arith.mulf %13, %13 : vector<1x128xf32>
    %17 = arith.subf %15, %16 : vector<1x128xf32>
    %cst_7 = arith.constant 0.000000e+00 : f32
    %18 = vector.broadcast %cst_7 : f32 to vector<1x128xf32>
    %19 = arith.maximumf %17, %18 : vector<1x128xf32>
    %20 = vector.broadcast %13 : vector<1x128xf32> to vector<8x128xf32>
    %21 = arith.subf %3, %20 : vector<8x128xf32>
    %cst_8 = arith.constant 9.99999974E-6 : f32
    %22 = vector.broadcast %cst_8 : f32 to vector<1x128xf32>
    %23 = arith.addf %19, %22 : vector<1x128xf32>
    %24 = math.rsqrt %23 : vector<1x128xf32>
    %25 = vector.broadcast %24 : vector<1x128xf32> to vector<8x128xf32>
    %26 = arith.mulf %21, %25 : vector<8x128xf32>
    %27 = vector.broadcast %5 : vector<1x128xf32> to vector<8x128xf32>
    %28 = arith.mulf %26, %27 : vector<8x128xf32>
    %29 = vector.broadcast %6 : vector<1x128xf32> to vector<8x128xf32>
    %30 = arith.addf %28, %29 : vector<8x128xf32>
    %c0_9 = arith.constant 0 : index
    %c0_10 = arith.constant 0 : index
    %31 = vector.load %arg10[%c0_9, %c0_10] : memref<8x128xf32, #tpu.memory_space<vmem>>, vector<8x128xf32>
    %32 = arith.truncf %30 : vector<8x128xf32> to vector<8x128xbf16>
    %c0_11 = arith.constant 0 : index
    %c0_12 = arith.constant 0 : index
    %33 = vector.load %arg5[%c0_11, %c0_12] : memref<128x128xbf16, #tpu.memory_space<vmem>>, vector<128x128xbf16>
    %cst_13 = arith.constant dense<0.000000e+00> : vector<8x128xf32>
    %34 = tpu.matmul %32, %33, %cst_13 {dimension_numbers = #tpu.dot_dimension_numbers<[1], [0], [0], [1], [0, 0, 1, 1], [], []>} : vector<8x128xbf16>, vector<128x128xbf16>, vector<8x128xf32> -> vector<8x128xf32>
    %35 = arith.addf %31, %34 : vector<8x128xf32>
    %c0_14 = arith.constant 0 : index
    %c0_15 = arith.constant 0 : index
    %36 = vector.load %arg10[%c0_14, %c0_15] : memref<8x128xf32, #tpu.memory_space<vmem>>, vector<8x128xf32>
    tpu.vector_store %arg10[%c0_14, %c0_15], %35 {strides = array<i32>} : memref<8x128xf32, #tpu.memory_space<vmem>>, vector<8x128xf32>,
    %c1_i32 = arith.constant 1 : i32
    %37 = arith.cmpi eq, %arg0, %c1_i32 : i32
    %38 = arith.extui %37 : i1 to i32
    %c0_i32_16 = arith.constant 0 : i32
    %39 = arith.cmpi ne, %38, %c0_i32_16 : i32
    scf.if %39 {
      %c0_17 = arith.constant 0 : index
      %c0_18 = arith.constant 0 : index
      %40 = vector.load %arg3[%c0_17, %c0_18] : memref<6x128xf32, #tpu.memory_space<vmem>>, vector<6x128xf32>
      %c0_19 = arith.constant 0 : index
      %c0_20 = arith.constant 0 : index
      %41 = vector.load %arg4[%c0_19, %c0_20] : memref<2x128xf32, #tpu.memory_space<vmem>>, vector<2x128xf32>
      %c0_21 = arith.constant 0 : index
      %c0_22 = arith.constant 0 : index
      %42 = vector.load %arg10[%c0_21, %c0_22] : memref<8x128xf32, #tpu.memory_space<vmem>>, vector<8x128xf32>
      %43 = vector.extract_strided_slice %40 {offsets = [0, 0], sizes = [1, 128], strides = [1, 1]} : vector<6x128xf32> to vector<1x128xf32>
      %44 = vector.extract_strided_slice %40 {offsets = [1, 0], sizes = [1, 128], strides = [1, 1]} : vector<6x128xf32> to vector<1x128xf32>
      %cst_23 = arith.constant dense<0.000000e+00> : vector<128xf32>
      %45 = vector.multi_reduction <add>, %42, %cst_23 [0] : vector<8x128xf32> to vector<128xf32>
      %46 = vector.shape_cast %45 : vector<128xf32> to vector<1x128xf32>
      %47 = arith.mulf %42, %42 : vector<8x128xf32>
      %cst_24 = arith.constant dense<0.000000e+00> : vector<128xf32>
      %48 = vector.multi_reduction <add>, %47, %cst_24 [0] : vector<8x128xf32> to vector<128xf32>
      %49 = vector.shape_cast %48 : vector<128xf32> to vector<1x128xf32>
      %cst_25 = arith.constant 1.250000e-01 : f32
      %50 = vector.broadcast %cst_25 : f32 to vector<1x128xf32>
      %51 = arith.mulf %46, %50 : vector<1x128xf32>
      %cst_26 = arith.constant 1.250000e-01 : f32
      %52 = vector.broadcast %cst_26 : f32 to vector<1x128xf32>
      %53 = arith.mulf %49, %52 : vector<1x128xf32>
      %54 = arith.mulf %51, %51 : vector<1x128xf32>
      %55 = arith.subf %53, %54 : vector<1x128xf32>
      %cst_27 = arith.constant 0.000000e+00 : f32
      %56 = vector.broadcast %cst_27 : f32 to vector<1x128xf32>
      %57 = arith.maximumf %55, %56 : vector<1x128xf32>
      %58 = vector.broadcast %51 : vector<1x128xf32> to vector<8x128xf32>
      %59 = arith.subf %42, %58 : vector<8x128xf32>
      %cst_28 = arith.constant 9.99999974E-6 : f32
      %60 = vector.broadcast %cst_28 : f32 to vector<1x128xf32>
      %61 = arith.addf %57, %60 : vector<1x128xf32>
      %62 = math.rsqrt %61 : vector<1x128xf32>
      %63 = vector.broadcast %62 : vector<1x128xf32> to vector<8x128xf32>
      %64 = arith.mulf %59, %63 : vector<8x128xf32>
      %65 = vector.broadcast %43 : vector<1x128xf32> to vector<8x128xf32>
      %66 = arith.mulf %64, %65 : vector<8x128xf32>
      %67 = vector.broadcast %44 : vector<1x128xf32> to vector<8x128xf32>
      %68 = arith.addf %66, %67 : vector<8x128xf32>
      %cst_29 = arith.constant 0.000000e+00 : f32
      %69 = vector.broadcast %cst_29 : f32 to vector<8x128xf32>
      %70 = arith.maximumf %68, %69 : vector<8x128xf32>
      %71 = arith.truncf %70 : vector<8x128xf32> to vector<8x128xbf16>
      %c0_30 = arith.constant 0 : index
      %c0_31 = arith.constant 0 : index
      %72 = vector.load %arg6[%c0_30, %c0_31] : memref<128x128xbf16, #tpu.memory_space<vmem>>, vector<128x128xbf16>
      %cst_32 = arith.constant dense<0.000000e+00> : vector<8x128xf32>
      %73 = tpu.matmul %71, %72, %cst_32 {dimension_numbers = #tpu.dot_dimension_numbers<[1], [0], [0], [1], [0, 0, 1, 1], [], []>} : vector<8x128xbf16>, vector<128x128xbf16>, vector<8x128xf32> -> vector<8x128xf32>
      %74 = vector.extract_strided_slice %40 {offsets = [2, 0], sizes = [1, 128], strides = [1, 1]} : vector<6x128xf32> to vector<1x128xf32>
      %75 = vector.extract_strided_slice %40 {offsets = [3, 0], sizes = [1, 128], strides = [1, 1]} : vector<6x128xf32> to vector<1x128xf32>
      %cst_33 = arith.constant dense<0.000000e+00> : vector<128xf32>
      %76 = vector.multi_reduction <add>, %73, %cst_33 [0] : vector<8x128xf32> to vector<128xf32>
      %77 = vector.shape_cast %76 : vector<128xf32> to vector<1x128xf32>
      %78 = arith.mulf %73, %73 : vector<8x128xf32>
      %cst_34 = arith.constant dense<0.000000e+00> : vector<128xf32>
      %79 = vector.multi_reduction <add>, %78, %cst_34 [0] : vector<8x128xf32> to vector<128xf32>
      %80 = vector.shape_cast %79 : vector<128xf32> to vector<1x128xf32>
      %cst_35 = arith.constant 1.250000e-01 : f32
      %81 = vector.broadcast %cst_35 : f32 to vector<1x128xf32>
      %82 = arith.mulf %77, %81 : vector<1x128xf32>
      %cst_36 = arith.constant 1.250000e-01 : f32
      %83 = vector.broadcast %cst_36 : f32 to vector<1x128xf32>
      %84 = arith.mulf %80, %83 : vector<1x128xf32>
      %85 = arith.mulf %82, %82 : vector<1x128xf32>
      %86 = arith.subf %84, %85 : vector<1x128xf32>
      %cst_37 = arith.constant 0.000000e+00 : f32
      %87 = vector.broadcast %cst_37 : f32 to vector<1x128xf32>
      %88 = arith.maximumf %86, %87 : vector<1x128xf32>
      %89 = vector.broadcast %82 : vector<1x128xf32> to vector<8x128xf32>
      %90 = arith.subf %73, %89 : vector<8x128xf32>
      %cst_38 = arith.constant 9.99999974E-6 : f32
      %91 = vector.broadcast %cst_38 : f32 to vector<1x128xf32>
      %92 = arith.addf %88, %91 : vector<1x128xf32>
      %93 = math.rsqrt %92 : vector<1x128xf32>
      %94 = vector.broadcast %93 : vector<1x128xf32> to vector<8x128xf32>
      %95 = arith.mulf %90, %94 : vector<8x128xf32>
      %96 = vector.broadcast %74 : vector<1x128xf32> to vector<8x128xf32>
      %97 = arith.mulf %95, %96 : vector<8x128xf32>
      %98 = vector.broadcast %75 : vector<1x128xf32> to vector<8x128xf32>
      %99 = arith.addf %97, %98 : vector<8x128xf32>
      %cst_39 = arith.constant 0.000000e+00 : f32
      %100 = vector.broadcast %cst_39 : f32 to vector<8x128xf32>
      %101 = arith.maximumf %99, %100 : vector<8x128xf32>
      %102 = arith.truncf %101 : vector<8x128xf32> to vector<8x128xbf16>
      %c0_40 = arith.constant 0 : index
      %c0_41 = arith.constant 0 : index
      %103 = vector.load %arg7[%c0_40, %c0_41] : memref<128x128xbf16, #tpu.memory_space<vmem>>, vector<128x128xbf16>
      %cst_42 = arith.constant dense<0.000000e+00> : vector<8x128xf32>
      %104 = tpu.matmul %102, %103, %cst_42 {dimension_numbers = #tpu.dot_dimension_numbers<[1], [0], [0], [1], [0, 0, 1, 1], [], []>} : vector<8x128xbf16>, vector<128x128xbf16>, vector<8x128xf32> -> vector<8x128xf32>
      %105 = vector.extract_strided_slice %40 {offsets = [4, 0], sizes = [1, 128], strides = [1, 1]} : vector<6x128xf32> to vector<1x128xf32>
      %106 = vector.extract_strided_slice %40 {offsets = [5, 0], sizes = [1, 128], strides = [1, 1]} : vector<6x128xf32> to vector<1x128xf32>
      %cst_43 = arith.constant dense<0.000000e+00> : vector<128xf32>
      %107 = vector.multi_reduction <add>, %104, %cst_43 [0] : vector<8x128xf32> to vector<128xf32>
      %108 = vector.shape_cast %107 : vector<128xf32> to vector<1x128xf32>
      %109 = arith.mulf %104, %104 : vector<8x128xf32>
      %cst_44 = arith.constant dense<0.000000e+00> : vector<128xf32>
      %110 = vector.multi_reduction <add>, %109, %cst_44 [0] : vector<8x128xf32> to vector<128xf32>
      %111 = vector.shape_cast %110 : vector<128xf32> to vector<1x128xf32>
      %cst_45 = arith.constant 1.250000e-01 : f32
      %112 = vector.broadcast %cst_45 : f32 to vector<1x128xf32>
      %113 = arith.mulf %108, %112 : vector<1x128xf32>
      %cst_46 = arith.constant 1.250000e-01 : f32
      %114 = vector.broadcast %cst_46 : f32 to vector<1x128xf32>
      %115 = arith.mulf %111, %114 : vector<1x128xf32>
      %116 = arith.mulf %113, %113 : vector<1x128xf32>
      %117 = arith.subf %115, %116 : vector<1x128xf32>
      %cst_47 = arith.constant 0.000000e+00 : f32
      %118 = vector.broadcast %cst_47 : f32 to vector<1x128xf32>
      %119 = arith.maximumf %117, %118 : vector<1x128xf32>
      %120 = vector.broadcast %113 : vector<1x128xf32> to vector<8x128xf32>
      %121 = arith.subf %104, %120 : vector<8x128xf32>
      %cst_48 = arith.constant 9.99999974E-6 : f32
      %122 = vector.broadcast %cst_48 : f32 to vector<1x128xf32>
      %123 = arith.addf %119, %122 : vector<1x128xf32>
      %124 = math.rsqrt %123 : vector<1x128xf32>
      %125 = vector.broadcast %124 : vector<1x128xf32> to vector<8x128xf32>
      %126 = arith.mulf %121, %125 : vector<8x128xf32>
      %127 = vector.broadcast %105 : vector<1x128xf32> to vector<8x128xf32>
      %128 = arith.mulf %126, %127 : vector<8x128xf32>
      %129 = vector.broadcast %106 : vector<1x128xf32> to vector<8x128xf32>
      %130 = arith.addf %128, %129 : vector<8x128xf32>
      %cst_49 = arith.constant 0.000000e+00 : f32
      %131 = vector.broadcast %cst_49 : f32 to vector<8x128xf32>
      %132 = arith.maximumf %130, %131 : vector<8x128xf32>
      %133 = arith.truncf %132 : vector<8x128xf32> to vector<8x128xbf16>
      %c0_50 = arith.constant 0 : index
      %c0_51 = arith.constant 0 : index
      %134 = vector.load %arg8[%c0_50, %c0_51] : memref<128x128xbf16, #tpu.memory_space<vmem>>, vector<128x128xbf16>
      %cst_52 = arith.constant dense<0.000000e+00> : vector<8x128xf32>
      %135 = tpu.matmul %133, %134, %cst_52 {dimension_numbers = #tpu.dot_dimension_numbers<[1], [0], [0], [1], [0, 0, 1, 1], [], []>} : vector<8x128xbf16>, vector<128x128xbf16>, vector<8x128xf32> -> vector<8x128xf32>
      %136 = vector.extract_strided_slice %41 {offsets = [0, 0], sizes = [1, 128], strides = [1, 1]} : vector<2x128xf32> to vector<1x128xf32>
      %137 = vector.extract_strided_slice %41 {offsets = [1, 0], sizes = [1, 128], strides = [1, 1]} : vector<2x128xf32> to vector<1x128xf32>
      %cst_53 = arith.constant dense<0.000000e+00> : vector<128xf32>
      %138 = vector.multi_reduction <add>, %135, %cst_53 [0] : vector<8x128xf32> to vector<128xf32>
      %139 = vector.shape_cast %138 : vector<128xf32> to vector<1x128xf32>
      %140 = arith.mulf %135, %135 : vector<8x128xf32>
      %cst_54 = arith.constant dense<0.000000e+00> : vector<128xf32>
      %141 = vector.multi_reduction <add>, %140, %cst_54 [0] : vector<8x128xf32> to vector<128xf32>
      %142 = vector.shape_cast %141 : vector<128xf32> to vector<1x128xf32>
      %cst_55 = arith.constant 1.250000e-01 : f32
      %143 = vector.broadcast %cst_55 : f32 to vector<1x128xf32>
      %144 = arith.mulf %139, %143 : vector<1x128xf32>
      %cst_56 = arith.constant 1.250000e-01 : f32
      %145 = vector.broadcast %cst_56 : f32 to vector<1x128xf32>
      %146 = arith.mulf %142, %145 : vector<1x128xf32>
      %147 = arith.mulf %144, %144 : vector<1x128xf32>
      %148 = arith.subf %146, %147 : vector<1x128xf32>
      %cst_57 = arith.constant 0.000000e+00 : f32
      %149 = vector.broadcast %cst_57 : f32 to vector<1x128xf32>
      %150 = arith.maximumf %148, %149 : vector<1x128xf32>
      %151 = vector.broadcast %144 : vector<1x128xf32> to vector<8x128xf32>
      %152 = arith.subf %135, %151 : vector<8x128xf32>
      %cst_58 = arith.constant 9.99999974E-6 : f32
      %153 = vector.broadcast %cst_58 : f32 to vector<1x128xf32>
      %154 = arith.addf %150, %153 : vector<1x128xf32>
      %155 = math.rsqrt %154 : vector<1x128xf32>
      %156 = vector.broadcast %155 : vector<1x128xf32> to vector<8x128xf32>
      %157 = arith.mulf %152, %156 : vector<8x128xf32>
      %158 = vector.broadcast %136 : vector<1x128xf32> to vector<8x128xf32>
      %159 = arith.mulf %157, %158 : vector<8x128xf32>
      %160 = vector.broadcast %137 : vector<1x128xf32> to vector<8x128xf32>
      %161 = arith.addf %159, %160 : vector<8x128xf32>
      %c0_59 = arith.constant 0 : index
      %c0_60 = arith.constant 0 : index
      %162 = vector.load %arg9[%c0_59, %c0_60] : memref<8x128xf32, #tpu.memory_space<vmem>>, vector<8x128xf32>
      tpu.vector_store %arg9[%c0_59, %c0_60], %161 {strides = array<i32>} : memref<8x128xf32, #tpu.memory_space<vmem>>, vector<8x128xf32>,
    } else {
    }
    return
  }
  func.func @transform_0(%arg0: i32) -> (i32, i32) {
    %c0_i32 = arith.constant 0 : i32
    %c0_i32_0 = arith.constant 0 : i32
    return %c0_i32, %arg0 : i32, i32
  }
  func.func @transform_1(%arg0: i32) -> (i32, i32) {
    %c0_i32 = arith.constant 0 : i32
    %c0_i32_0 = arith.constant 0 : i32
    return %c0_i32, %arg0 : i32, i32
  }
  func.func @transform_2(%arg0: i32) -> (i32, i32) {
    %c0_i32 = arith.constant 0 : i32
    %c0_i32_0 = arith.constant 0 : i32
    %c0_i32_1 = arith.constant 0 : i32
    return %c0_i32, %c0_i32_0 : i32, i32
  }
  func.func @transform_3(%arg0: i32) -> (i32, i32) {
    %c0_i32 = arith.constant 0 : i32
    %c0_i32_0 = arith.constant 0 : i32
    %c0_i32_1 = arith.constant 0 : i32
    return %c0_i32, %c0_i32_0 : i32, i32
  }
  func.func @transform_4(%arg0: i32) -> (i32, i32) {
    %c0_i32 = arith.constant 0 : i32
    %c0_i32_0 = arith.constant 0 : i32
    return %arg0, %c0_i32 : i32, i32
  }
  func.func @transform_5(%arg0: i32) -> (i32, i32) {
    %c0_i32 = arith.constant 0 : i32
    %c0_i32_0 = arith.constant 0 : i32
    %c0_i32_1 = arith.constant 0 : i32
    return %c0_i32, %c0_i32_0 : i32, i32
  }
  func.func @transform_6(%arg0: i32) -> (i32, i32) {
    %c0_i32 = arith.constant 0 : i32
    %c0_i32_0 = arith.constant 0 : i32
    %c0_i32_1 = arith.constant 0 : i32
    return %c0_i32, %c0_i32_0 : i32, i32
  }
  func.func @transform_7(%arg0: i32) -> (i32, i32) {
    %c0_i32 = arith.constant 0 : i32
    %c0_i32_0 = arith.constant 0 : i32
    %c0_i32_1 = arith.constant 0 : i32
    return %c0_i32, %c0_i32_0 : i32, i32
  }
  func.func @transform_8(%arg0: i32) -> (i32, i32) {
    %c0_i32 = arith.constant 0 : i32
    %c0_i32_0 = arith.constant 0 : i32
    %c0_i32_1 = arith.constant 0 : i32
    return %c0_i32, %c0_i32_0 : i32, i32
  }
}

</mosaic_0001>

<llo_original>
// kernel: tpu_custom_call.1
$region0: #{tpu_custom_call.1}
  #allocation0 [shape = 'u32[]', space=smem, size = 0x4, offset = 0x4, fixed_abs, tag = 'smem constant byte address 0x4 - core index']
  #allocation1 [shape = 'u32[144,128]{1,0:T(1,128)}', space=vmem, size = 0x12000, scoped, tag = 'internal scratch']
  #allocation2 [shape = 'f32[8,128]{1,0:T(8,128)}', space=vmem, size = 0x1000, scoped, tag = 'scratch operand']
  %s0 = inlined_call_operand.hbm [shape: f32[8,256], index: 0, kind: input, shape index: {}]
  %s1 = inlined_call_operand.hbm [shape: f32[2,256], index: 1, kind: input, shape index: {}]
  %s2 = inlined_call_operand.hbm [shape: f32[6,128], index: 2, kind: input, shape index: {}]
  %s3 = inlined_call_operand.vmem [shape: f32[2,128], index: 3, kind: input, shape index: {}]
  %s4 = inlined_call_operand.hbm [shape: bf16[256,128], index: 4, kind: input, shape index: {}]
  %s5 = inlined_call_operand.hbm [shape: bf16[128,128], index: 5, kind: input, shape index: {}]
  %s6 = inlined_call_operand.hbm [shape: bf16[128,128], index: 6, kind: input, shape index: {}]
  %s7 = inlined_call_operand.hbm [shape: bf16[128,128], index: 7, kind: input, shape index: {}]
  %s8 = inlined_call_operand.hbm [shape: f32[8,128], index: 8, kind: output, shape index: {}]
  %s9 = sld [smem:[#allocation0]]
  $region101: #{tpu_custom_call.1} parent=0
    _
  %s11 = ssub.s32 1, %s9
  %s12 = scalar_select 0, %s11, %s9
  $region1: #{tpu_custom_call.1} parent=0
    #allocation3 [shape = 'u8[8192]{0}', space=vmem, size = 0x2000, scoped, tag = 'input window, operand 0']
    #allocation4 [shape = 's32[2]{0}', space=sflag, size = 0x8, scoped, tag = 'scoped memory for tpu_custom_call.1']
    #allocation5 [shape = 's32[2]{0}', space=sflag, size = 0x8, scoped, tag = 'scoped memory for tpu_custom_call.1']
    #allocation6 [shape = 'u8[2048]{0}', space=vmem, size = 0x800, scoped, tag = 'input window, operand 1']
    #allocation7 [shape = 's32[2]{0}', space=sflag, size = 0x8, scoped, tag = 'scoped memory for tpu_custom_call.1']
    #allocation8 [shape = 'u8[4096]{0}', space=vmem, size = 0x1000, scoped, tag = 'input window, operand 2, single buffered']
    #allocation9 [shape = 'u8[65536]{0}', space=vmem, size = 0x10000, scoped, tag = 'input window, operand 4']
    #allocation10 [shape = 's32[2]{0}', space=sflag, size = 0x8, scoped, tag = 'scoped memory for tpu_custom_call.1']
    #allocation11 [shape = 'u8[32768]{0}', space=vmem, size = 0x8000, scoped, tag = 'input window, operand 5, single buffered']
    #allocation12 [shape = 'u8[32768]{0}', space=vmem, size = 0x8000, scoped, tag = 'input window, operand 6, single buffered']
    #allocation13 [shape = 's32[1]{0}', space=sflag, size = 0x4, scoped, tag = 'scoped memory for tpu_custom_call.1']
    #allocation14 [shape = 'u8[32768]{0}', space=vmem, size = 0x8000, scoped, tag = 'input window, operand 7, single buffered']
    #allocation15 [shape = 'u8[4096]{0}', space=vmem, size = 0x1000, scoped, tag = 'output window, operand 0, single buffered']
    %13 = vsyncpa [#allocation4], 0
    %s14 = scalar_lea.sflag [#allocation4], 1
    %15 = vsyncpa %s14, 0
    %16 = vsyncpa [#allocation7], 0
    %s17 = scalar_lea.sflag [#allocation7], 1
    %18 = vsyncpa %s17, 0
    %19 = vsyncpa [#allocation10], 0
    %s20 = scalar_lea.sflag [#allocation10], 1
    %21 = vsyncpa %s20, 0
    %22 = vsyncpa [#allocation13], 0
    %23 = vsyncpa [#allocation5], 0
    loop: start=0, step=1, limit=4
    $region2: #{tpu_custom_call.1} parent=1 // loop_pre_header
      _
    $region3: #{tpu_custom_call.1} parent=1 // loop_header
      %s25 = sphi 0, %s29
      %p26 = scmp.ge.s32.totalorder %s25, 4
      %s35 = sphi 0, %s37
      %s38 = sphi 0, %s35
      %s39 = sphi 0, %s38
      %s55 = sphi 0, %s39
      %s61 = sphi 0, %s63
      %s64 = sphi 0, %s61
      %s65 = sphi 0, %s64
      %s81 = sphi 0, %s65
      %s85 = sphi 0, %s85
      %s87 = sphi 0, %s85
      %s88 = sphi 0, %s87
      %s102 = sphi 0, %s88
      %s106 = sphi 0, %s106
      %s108 = sphi 0, %s106
      %s109 = sphi 0, %s108
      %s123 = sphi 0, %s109
      %s129 = sphi 0, %s131
      %s132 = sphi 0, %s129
      %s133 = sphi 0, %s132
      %s149 = sphi 0, %s133
      %s153 = sphi 0, %s153
      %s155 = sphi 0, %s153
      %s156 = sphi 0, %s155
      %s170 = sphi 0, %s156
      %s174 = sphi 0, %s174
      %s176 = sphi 0, %s174
      %s177 = sphi 0, %s176
      %s191 = sphi 0, %s177
      %s195 = sphi 0, %s195
      %s197 = sphi 0, %s195
      %s198 = sphi 0, %s197
      %s212 = sphi 0, %s198
      %s216 = sphi 0, %s216
      %s218 = sphi 0, %s216
      %s219 = sphi 0, %s218
      %s233 = sphi 0, %s219
    $region4: #{tpu_custom_call.1} parent=1 // loop_header_branch
      %28 = sbr.rel (%p26) target = $region8
    $region5: #{tpu_custom_call.1} parent=1 // loop_body
      %s30 = ssub.s32 %s25, 1
      %s31 = ssub.s32 %s25, 2
      %s32 = sadd.s32 %s25, 1
      %s33 = ssub.s32 %s25, %s32
      %p34 = scmp.eq.s32.totalorder %s33, 0
      %s36 = sadd.s32 %s35, 1
      %s37 = scalar_select %p34, %s35, %s36
      %p40 = pneg %p34
      %p41 = scmp.eq.s32.totalorder %s25, 1
      %p42 = por %p40, %p41
      %p43 = scmp.ne.s32.totalorder %s35, %s38
      %p44 = scmp.eq.s32.totalorder %s25, 0
      %p45 = por %p43, %p44
      %p46 = scmp.ne.s32.totalorder %s35, %s38
      %p47 = scmp.eq.s32.totalorder %s30, 1
      %p48 = por %p46, %p47
      %p49 = scmp.ne.s32.totalorder %s38, %s39
      %p50 = scmp.eq.s32.totalorder %s30, 0
      %p51 = por %p49, %p50
      %p52 = scmp.ne.s32.totalorder %s38, %s39
      %p53 = scmp.eq.s32.totalorder %s31, 1
      %p54 = por %p52, %p53
      %p56 = scmp.ne.s32.totalorder %s39, %s55
      %p57 = scmp.eq.s32.totalorder %s31, 0
      %p58 = por %p56, %p57
      %s59 = ssub.s32 %s25, %s32
      %p60 = scmp.eq.s32.totalorder %s59, 0
      %s62 = sadd.s32 %s61, 1
      %s63 = scalar_select %p60, %s61, %s62
      %p66 = pneg %p60
      %p67 = scmp.eq.s32.totalorder %s25, 1
      %p68 = por %p66, %p67
      %p69 = scmp.ne.s32.totalorder %s61, %s64
      %p70 = scmp.eq.s32.totalorder %s25, 0
      %p71 = por %p69, %p70
      %p72 = scmp.ne.s32.totalorder %s61, %s64
      %p73 = scmp.eq.s32.totalorder %s30, 1
      %p74 = por %p72, %p73
      %p75 = scmp.ne.s32.totalorder %s64, %s65
      %p76 = scmp.eq.s32.totalorder %s30, 0
      %p77 = por %p75, %p76
      %p78 = scmp.ne.s32.totalorder %s64, %s65
      %p79 = scmp.eq.s32.totalorder %s31, 1
      %p80 = por %p78, %p79
      %p82 = scmp.ne.s32.totalorder %s65, %s81
      %p83 = scmp.eq.s32.totalorder %s31, 0
      %p84 = por %p82, %p83
      %s86 = sadd.s32 %s85, 1
      %p89 = scmp.eq.s32.totalorder %s25, 1
      %p90 = scmp.ne.s32.totalorder %s85, %s87
      %p91 = scmp.eq.s32.totalorder %s25, 0
      %p92 = por %p90, %p91
      %p93 = scmp.ne.s32.totalorder %s85, %s87
      %p94 = scmp.eq.s32.totalorder %s30, 1
      %p95 = por %p93, %p94
      %p96 = scmp.ne.s32.totalorder %s87, %s88
      %p97 = scmp.eq.s32.totalorder %s30, 0
      %p98 = por %p96, %p97
      %p99 = scmp.ne.s32.totalorder %s87, %s88
      %p100 = scmp.eq.s32.totalorder %s31, 1
      %p101 = por %p99, %p100
      %p103 = scmp.ne.s32.totalorder %s88, %s102
      %p104 = scmp.eq.s32.totalorder %s31, 0
      %p105 = por %p103, %p104
      %s107 = sadd.s32 %s106, 1
      %p110 = scmp.eq.s32.totalorder %s25, 1
      %p111 = scmp.ne.s32.totalorder %s106, %s108
      %p112 = scmp.eq.s32.totalorder %s25, 0
      %p113 = por %p111, %p112
      %p114 = scmp.ne.s32.totalorder %s106, %s108
      %p115 = scmp.eq.s32.totalorder %s30, 1
      %p116 = por %p114, %p115
      %p117 = scmp.ne.s32.totalorder %s108, %s109
      %p118 = scmp.eq.s32.totalorder %s30, 0
      %p119 = por %p117, %p118
      %p120 = scmp.ne.s32.totalorder %s108, %s109
      %p121 = scmp.eq.s32.totalorder %s31, 1
      %p122 = por %p120, %p121
      %p124 = scmp.ne.s32.totalorder %s109, %s123
      %p125 = scmp.eq.s32.totalorder %s31, 0
      %p126 = por %p124, %p125
      %s127 = ssub.s32 %s25, %s32
      %p128 = scmp.eq.s32.totalorder %s127, 0
      %s130 = sadd.s32 %s129, 1
      %s131 = scalar_select %p128, %s129, %s130
      %p134 = pneg %p128
      %p135 = scmp.eq.s32.totalorder %s25, 1
      %p136 = por %p134, %p135
      %p137 = scmp.ne.s32.totalorder %s129, %s132
      %p138 = scmp.eq.s32.totalorder %s25, 0
      %p139 = por %p137, %p138
      %p140 = scmp.ne.s32.totalorder %s129, %s132
      %p141 = scmp.eq.s32.totalorder %s30, 1
      %p142 = por %p140, %p141
      %p143 = scmp.ne.s32.totalorder %s132, %s133
      %p144 = scmp.eq.s32.totalorder %s30, 0
      %p145 = por %p143, %p144
      %p146 = scmp.ne.s32.totalorder %s132, %s133
      %p147 = scmp.eq.s32.totalorder %s31, 1
      %p148 = por %p146, %p147
      %p150 = scmp.ne.s32.totalorder %s133, %s149
      %p151 = scmp.eq.s32.totalorder %s31, 0
      %p152 = por %p150, %p151
      %s154 = sadd.s32 %s153, 1
      %p157 = scmp.eq.s32.totalorder %s25, 1
      %p158 = scmp.ne.s32.totalorder %s153, %s155
      %p159 = scmp.eq.s32.totalorder %s25, 0
      %p160 = por %p158, %p159
      %p161 = scmp.ne.s32.totalorder %s153, %s155
      %p162 = scmp.eq.s32.totalorder %s30, 1
      %p163 = por %p161, %p162
      %p164 = scmp.ne.s32.totalorder %s155, %s156
      %p165 = scmp.eq.s32.totalorder %s30, 0
      %p166 = por %p164, %p165
      %p167 = scmp.ne.s32.totalorder %s155, %s156
      %p168 = scmp.eq.s32.totalorder %s31, 1
      %p169 = por %p167, %p168
      %p171 = scmp.ne.s32.totalorder %s156, %s170
      %p172 = scmp.eq.s32.totalorder %s31, 0
      %p173 = por %p171, %p172
      %s175 = sadd.s32 %s174, 1
      %p178 = scmp.eq.s32.totalorder %s25, 1
      %p179 = scmp.ne.s32.totalorder %s174, %s176
      %p180 = scmp.eq.s32.totalorder %s25, 0
      %p181 = por %p179, %p180
      %p182 = scmp.ne.s32.totalorder %s174, %s176
      %p183 = scmp.eq.s32.totalorder %s30, 1
      %p184 = por %p182, %p183
      %p185 = scmp.ne.s32.totalorder %s176, %s177
      %p186 = scmp.eq.s32.totalorder %s30, 0
      %p187 = por %p185, %p186
      %p188 = scmp.ne.s32.totalorder %s176, %s177
      %p189 = scmp.eq.s32.totalorder %s31, 1
      %p190 = por %p188, %p189
      %p192 = scmp.ne.s32.totalorder %s177, %s191
      %p193 = scmp.eq.s32.totalorder %s31, 0
      %p194 = por %p192, %p193
      %s196 = sadd.s32 %s195, 1
      %p199 = scmp.eq.s32.totalorder %s25, 1
      %p200 = scmp.ne.s32.totalorder %s195, %s197
      %p201 = scmp.eq.s32.totalorder %s25, 0
      %p202 = por %p200, %p201
      %p203 = scmp.ne.s32.totalorder %s195, %s197
      %p204 = scmp.eq.s32.totalorder %s30, 1
      %p205 = por %p203, %p204
      %p206 = scmp.ne.s32.totalorder %s197, %s198
      %p207 = scmp.eq.s32.totalorder %s30, 0
      %p208 = por %p206, %p207
      %p209 = scmp.ne.s32.totalorder %s197, %s198
      %p210 = scmp.eq.s32.totalorder %s31, 1
      %p211 = por %p209, %p210
      %p213 = scmp.ne.s32.totalorder %s198, %s212
      %p214 = scmp.eq.s32.totalorder %s31, 0
      %p215 = por %p213, %p214
      %s217 = sadd.s32 %s216, 1
      %p220 = scmp.eq.s32.totalorder %s25, 1
      %p221 = scmp.ne.s32.totalorder %s216, %s218
      %p222 = scmp.eq.s32.totalorder %s25, 0
      %p223 = por %p221, %p222
      %p224 = scmp.ne.s32.totalorder %s216, %s218
      %p225 = scmp.eq.s32.totalorder %s30, 1
      %p226 = por %p224, %p225
      %p227 = scmp.ne.s32.totalorder %s218, %s219
      %p228 = scmp.eq.s32.totalorder %s30, 0
      %p229 = por %p227, %p228
      %p230 = scmp.ne.s32.totalorder %s218, %s219
      %p231 = scmp.eq.s32.totalorder %s31, 1
      %p232 = por %p230, %p231
      %p234 = scmp.ne.s32.totalorder %s219, %s233
      %p235 = scmp.eq.s32.totalorder %s31, 0
      %p236 = por %p234, %p235
      %p237 = scmp.le.s32.totalorder 1, %s25
      %p238 = scmp.lt.s32.totalorder %s25, 3
      %p239 = pnand %p237, %p238
      %p240 = pneg %p239
      // Predicated region
      $region9: #{tpu_custom_call.1} parent=5 // pred_check
        _
      $region10: #{tpu_custom_call.1} parent=5 // pred_check_branch
        %242 = sbr.rel (%p239) target = $region12
      $region11: #{tpu_custom_call.1} parent=5 // pred_region
        %s243 = ssub.s32 %s25, 1
        // Predicated region
        $region13: #{tpu_custom_call.1} parent=11 // pred_check
          %p244 = pneg %p98
        $region14: #{tpu_custom_call.1} parent=11 // pred_check_branch
          %246 = sbr.rel (%p244) target = $region16
        $region15: #{tpu_custom_call.1} parent=11 // pred_region
          %s248 = ssub.s32 128, 128
          %249 = vsyncadd [#allocation7], %s248
          %s251 = sshll.u32 [#allocation8], 4
          %s252 = int_to_ptr.vmem [resolvable:$true] %s251
          %254 = dma.hbm_to_vmem [thread:$0]  %s2, 128, %s252, [#allocation7]
        $region16: #{tpu_custom_call.1} parent=11 // pred_fallthru
          _
        // Predicated region
        $region17: #{tpu_custom_call.1} parent=11 // pred_check
          %p255 = pneg %p119
        $region18: #{tpu_custom_call.1} parent=11 // pred_check_branch
          %257 = sbr.rel (%p255) target = $region20
        $region19: #{tpu_custom_call.1} parent=11 // pred_region
          _
        $region20: #{tpu_custom_call.1} parent=11 // pred_fallthru
          _
        // Predicated region
        $region21: #{tpu_custom_call.1} parent=11 // pred_check
          %p258 = pneg %p166
        $region22: #{tpu_custom_call.1} parent=11 // pred_check_branch
          %260 = sbr.rel (%p258) target = $region24
        $region23: #{tpu_custom_call.1} parent=11 // pred_region
          %s262 = ssub.s32 1024, 1024
          %263 = vsyncadd [#allocation10], %s262
          %s264 = sshll.u32 [#allocation11], 4
          %s265 = int_to_ptr.vmem [resolvable:$true] %s264
          %270 = dma.hbm_to_vmem [thread:$0]  %s5, 1024, %s265, [#allocation10], 64, 64, 4
        $region24: #{tpu_custom_call.1} parent=11 // pred_fallthru
          _
        // Predicated region
        $region25: #{tpu_custom_call.1} parent=11 // pred_check
          %p271 = pneg %p187
        $region26: #{tpu_custom_call.1} parent=11 // pred_check_branch
          %273 = sbr.rel (%p271) target = $region28
        $region27: #{tpu_custom_call.1} parent=11 // pred_region
          %s275 = ssub.s32 1024, 1024
          %276 = vsyncadd [#allocation13], %s275
          %s277 = sshll.u32 [#allocation12], 4
          %s278 = int_to_ptr.vmem [resolvable:$true] %s277
          %283 = dma.hbm_to_vmem [thread:$0]  %s6, 1024, %s278, [#allocation13], 64, 64, 4
        $region28: #{tpu_custom_call.1} parent=11 // pred_fallthru
          _
        // Predicated region
        $region29: #{tpu_custom_call.1} parent=11 // pred_check
          %p284 = pneg %p208
        $region30: #{tpu_custom_call.1} parent=11 // pred_check_branch
          %286 = sbr.rel (%p284) target = $region32
        $region31: #{tpu_custom_call.1} parent=11 // pred_region
          %s288 = ssub.s32 1024, 1024
          %289 = vsyncadd [#allocation13], %s288
          %s290 = sshll.u32 [#allocation14], 4
          %s291 = int_to_ptr.vmem [resolvable:$true] %s290
          %296 = dma.hbm_to_vmem [thread:$0]  %s7, 1024, %s291, [#allocation13], 64, 64, 4
        $region32: #{tpu_custom_call.1} parent=11 // pred_fallthru
          _
      $region12: #{tpu_custom_call.1} parent=5 // pred_fallthru
        _
      %p297 = scmp.lt.s32.totalorder %s25, 2
      // Predicated region
      $region33: #{tpu_custom_call.1} parent=5 // pred_check
        %p298 = pneg %p297
      $region34: #{tpu_custom_call.1} parent=5 // pred_check_branch
        %300 = sbr.rel (%p298) target = $region36
      $region35: #{tpu_custom_call.1} parent=5 // pred_region
        // Predicated region
        $region37: #{tpu_custom_call.1} parent=35 // pred_check
          %p301 = pneg %p45
        $region38: #{tpu_custom_call.1} parent=35 // pred_check_branch
          %303 = sbr.rel (%p301) target = $region40
        $region39: #{tpu_custom_call.1} parent=35 // pred_region
          %s304 = sand.u32 %s35, 1
          %s305 = scalar_lea.sflag [#allocation4], %s304
          %s306 = sand.u32 %s35, 1
          %s307 = smul.addr %s306, 8
          %s308 = scalar_lea.vmem [#allocation3], %s307
          %s310 = ssub.s32 128, 128
          %311 = vsyncadd %s305, %s310
          %s312 = smul.addr %s25, 128
          %s313 = scalar_lea.hbm %s0, %s312
          %s315 = sshll.u32 %s308, 4
          %s316 = int_to_ptr.vmem [resolvable:$true] %s315
          %318 = dma.hbm_to_vmem [thread:$0]  %s313, 128, %s316, %s305
        $region40: #{tpu_custom_call.1} parent=35 // pred_fallthru
          _
        // Predicated region
        $region41: #{tpu_custom_call.1} parent=35 // pred_check
          %p319 = pneg %p71
        $region42: #{tpu_custom_call.1} parent=35 // pred_check_branch
          %321 = sbr.rel (%p319) target = $region44
        $region43: #{tpu_custom_call.1} parent=35 // pred_region
          %s322 = sand.u32 %s25, 1
          %s323 = scalar_lea.sflag [#allocation7], %s322
          %s324 = sand.u32 %s61, 1
          %s325 = smul.addr %s324, 2
          %s326 = scalar_lea.vmem [#allocation6], %s325
          %s328 = ssub.s32 32, 32
          %329 = vsyncadd %s323, %s328
          %s330 = smul.addr %s25, 32
          %s331 = scalar_lea.hbm %s1, %s330
          %s333 = sshll.u32 %s326, 4
          %s334 = int_to_ptr.vmem [resolvable:$true] %s333
          %336 = dma.hbm_to_vmem [thread:$0]  %s331, 32, %s334, %s323
        $region44: #{tpu_custom_call.1} parent=35 // pred_fallthru
          _
        // Predicated region
        $region45: #{tpu_custom_call.1} parent=35 // pred_check
          %p337 = pneg %p139
        $region46: #{tpu_custom_call.1} parent=35 // pred_check_branch
          %339 = sbr.rel (%p337) target = $region48
        $region47: #{tpu_custom_call.1} parent=35 // pred_region
          %s340 = sand.u32 %s25, 1
          %s341 = scalar_lea.sflag [#allocation10], %s340
          %s342 = sand.u32 %s129, 1
          %s343 = smul.addr %s342, 64
          %s344 = scalar_lea.vmem [#allocation9], %s343
          %s345 = smul.u32 16, %s25
          %s347 = ssub.s32 1024, 1024
          %348 = vsyncadd %s341, %s347
          %s349 = smul.addr %s345, 64
          %s350 = scalar_lea.hbm %s4, %s349
          %s351 = sshll.u32 %s344, 4
          %s352 = int_to_ptr.vmem [resolvable:$true] %s351
          %357 = dma.hbm_to_vmem [thread:$0]  %s350, 1024, %s352, %s341, 64, 64, 4
        $region48: #{tpu_custom_call.1} parent=35 // pred_fallthru
          _
      $region36: #{tpu_custom_call.1} parent=5 // pred_fallthru
        _
      %p358 = scmp.le.s32.totalorder 1, %s25
      %p359 = scmp.lt.s32.totalorder %s25, 3
      %p360 = pnand %p358, %p359
      %p361 = pneg %p360
      // Predicated region
      $region49: #{tpu_custom_call.1} parent=5 // pred_check
        _
      $region50: #{tpu_custom_call.1} parent=5 // pred_check_branch
        %363 = sbr.rel (%p360) target = $region52
      $region51: #{tpu_custom_call.1} parent=5 // pred_region
        %s364 = ssub.s32 %s25, 1
        %s365 = sand.u32 %s38, 1
        %s366 = scalar_lea.sflag [#allocation4], %s365
        %s367 = sand.u32 %s38, 1
        %s368 = smul.addr %s367, 8
        %s369 = scalar_lea.vmem [#allocation3], %s368
        // Predicated region
        $region53: #{tpu_custom_call.1} parent=51 // pred_check
          %p370 = pneg %p51
        $region54: #{tpu_custom_call.1} parent=51 // pred_check_branch
          %372 = sbr.rel (%p370) target = $region56
        $region55: #{tpu_custom_call.1} parent=51 // pred_region
          %373 = dma.done %s366, 128
        $region56: #{tpu_custom_call.1} parent=51 // pred_fallthru
          _
        %s374 = sand.u32 %s30, 1
        %s375 = scalar_lea.sflag [#allocation7], %s374
        %s376 = sand.u32 %s64, 1
        %s377 = smul.addr %s376, 2
        %s378 = scalar_lea.vmem [#allocation6], %s377
        // Predicated region
        $region57: #{tpu_custom_call.1} parent=51 // pred_check
          %p379 = pneg %p77
        $region58: #{tpu_custom_call.1} parent=51 // pred_check_branch
          %381 = sbr.rel (%p379) target = $region60
        $region59: #{tpu_custom_call.1} parent=51 // pred_region
          %382 = dma.done %s375, 32
        $region60: #{tpu_custom_call.1} parent=51 // pred_fallthru
          _
        // Predicated region
        $region61: #{tpu_custom_call.1} parent=51 // pred_check
          %p383 = pneg %p98
        $region62: #{tpu_custom_call.1} parent=51 // pred_check_branch
          %385 = sbr.rel (%p383) target = $region64
        $region63: #{tpu_custom_call.1} parent=51 // pred_region
          %386 = dma.done [#allocation7], 128
        $region64: #{tpu_custom_call.1} parent=51 // pred_fallthru
          _
        %s387 = sand.u32 %s30, 1
        %s388 = scalar_lea.sflag [#allocation10], %s387
        %s389 = sand.u32 %s132, 1
        %s390 = smul.addr %s389, 64
        %s391 = scalar_lea.vmem [#allocation9], %s390
        // Predicated region
        $region65: #{tpu_custom_call.1} parent=51 // pred_check
          %p392 = pneg %p145
        $region66: #{tpu_custom_call.1} parent=51 // pred_check_branch
          %394 = sbr.rel (%p392) target = $region68
        $region67: #{tpu_custom_call.1} parent=51 // pred_region
          %395 = dma.done %s388, 1024
        $region68: #{tpu_custom_call.1} parent=51 // pred_fallthru
          _
        // Predicated region
        $region69: #{tpu_custom_call.1} parent=51 // pred_check
          %p396 = pneg %p166
        $region70: #{tpu_custom_call.1} parent=51 // pred_check_branch
          %398 = sbr.rel (%p396) target = $region72
        $region71: #{tpu_custom_call.1} parent=51 // pred_region
          %399 = dma.done [#allocation10], 1024
        $region72: #{tpu_custom_call.1} parent=51 // pred_fallthru
          _
        // Predicated region
        $region73: #{tpu_custom_call.1} parent=51 // pred_check
          %p400 = pneg %p187
        $region74: #{tpu_custom_call.1} parent=51 // pred_check_branch
          %402 = sbr.rel (%p400) target = $region76
        $region75: #{tpu_custom_call.1} parent=51 // pred_region
          %403 = dma.done [#allocation13], 1024
        $region76: #{tpu_custom_call.1} parent=51 // pred_fallthru
          _
        // Predicated region
        $region77: #{tpu_custom_call.1} parent=51 // pred_check
          %p404 = pneg %p208
        $region78: #{tpu_custom_call.1} parent=51 // pred_check_branch
          %406 = sbr.rel (%p404) target = $region80
        $region79: #{tpu_custom_call.1} parent=51 // pred_region
          %407 = dma.done [#allocation13], 1024
        $region80: #{tpu_custom_call.1} parent=51 // pred_fallthru
          _
        %s408 = sand.u32 %s38, 1
        %s409 = scalar_lea.sflag [#allocation4], %s408
        %s410 = sand.u32 %s38, 1
        %s411 = smul.addr %s410, 8
        %s412 = scalar_lea.vmem [#allocation3], %s411
        %p413 = pneg %p51
        %p414 = pneg %p48
        %s415 = sand.u32 %s30, 1
        %s416 = scalar_lea.sflag [#allocation7], %s415
        %s417 = sand.u32 %s64, 1
        %s418 = smul.addr %s417, 2
        %s419 = scalar_lea.vmem [#allocation6], %s418
        %p420 = pneg %p77
        %p421 = pneg %p74
        %p422 = pneg %p98
        %p423 = pneg %p95
        %p424 = pneg %p119
        %p425 = pneg %p116
        %s426 = sand.u32 %s30, 1
        %s427 = scalar_lea.sflag [#allocation10], %s426
        %s428 = sand.u32 %s132, 1
        %s429 = smul.addr %s428, 64
        %s430 = scalar_lea.vmem [#allocation9], %s429
        %p431 = pneg %p145
        %p432 = pneg %p142
        %p433 = pneg %p166
        %p434 = pneg %p163
        %p435 = pneg %p187
        %p436 = pneg %p184
        %p437 = pneg %p208
        %p438 = pneg %p205
        %p439 = pneg %p229
        %p440 = pneg %p226
        %s441 = smul.u32 16, %s30
        %p443 = scmp.eq.s32.totalorder %s30, 0
        // Predicated region
        $region81: #{tpu_custom_call.1} parent=51 // pred_check
          %p444 = pneg %p443
        $region82: #{tpu_custom_call.1} parent=51 // pred_check_branch
          %446 = sbr.rel (%p444) target = $region84
        $region83: #{tpu_custom_call.1} parent=51 // pred_region
          %447 = vst [vmem:[#allocation2] sm:$0xff] 0.0
        $region84: #{tpu_custom_call.1} parent=51 // pred_fallthru
          _
        %v448 = vld [vmem:[%s369] sm:$0xff]
        %v449 = vld [vmem:[%s378] sm:$0x3]
        %v450 = vrot.slane %v448, 4
        %v451 = vadd.f32 %v448, %v450
        %v452 = vrot.slane %v451, 2
        %v453 = vadd.f32 %v451, %v452
        %v454 = vrot.slane %v453, 1
        %v455 = vadd.f32 %v453, %v454
        %v456 = vmul.f32 %v448, %v448
        %v457 = vrot.slane %v456, 4
        %v458 = vadd.f32 %v456, %v457
        %v459 = vrot.slane %v458, 2
        %v460 = vadd.f32 %v458, %v459
        %v461 = vrot.slane %v460, 1
        %v462 = vadd.f32 %v460, %v461
        %v463 = vmul.f32 %v455, 0.125
        %v464 = vmul.f32 %v462, 0.125
        %v465 = vmul.f32 %v463, %v463
        %v466 = vsub.f32 %v464, %v465
        %v467 = vmax.f32 %v466, 0.0
        %v468 = vsub.f32 %v448, %v463
        %v469 = vadd.f32 %v467, 1e-05
        %v470 = vrsqrt.pop %v469
        %v471 = vmul.f32 %v468, %v470
        %v472 = vlaneseq
        %v473 = vshrl.u32 %v472, 7
        %v474 = vsub.s32 0, %v473
        %v475 = vrot.slane %v449, %v474
        %v476 = vmul.f32 %v471, %v475
        %v477 = vlaneseq
        %v478 = vshrl.u32 %v477, 7
        %v479 = vsub.s32 1, %v478
        %v480 = vrot.slane %v449, %v479
        %v481 = vadd.f32 %v476, %v480
        %v482 = vld [vmem:[#allocation2] sm:$0xff]
        %v483 = vpack.c.bf16 %v481, %v481
        %v484 = vld [vmem:[%s391] sm:$0xf]
        %v485 = vld [vmem:[%s391 + $0x4] sm:$0xf]
        %v486 = vld [vmem:[%s391 + $0x8] sm:$0xf]
        %v487 = vld [vmem:[%s391 + $0xc] sm:$0xf]
        %v488 = vld [vmem:[%s391 + $0x10] sm:$0xf]
        %v489 = vld [vmem:[%s391 + $0x14] sm:$0xf]
        %v490 = vld [vmem:[%s391 + $0x18] sm:$0xf]
        %v491 = vld [vmem:[%s391 + $0x1c] sm:$0xf]
        %v492 = vld [vmem:[%s391 + $0x20] sm:$0xf]
        %v493 = vld [vmem:[%s391 + $0x24] sm:$0xf]
        %v494 = vld [vmem:[%s391 + $0x28] sm:$0xf]
        %v495 = vld [vmem:[%s391 + $0x2c] sm:$0xf]
        %v496 = vld [vmem:[%s391 + $0x30] sm:$0xf]
        %v497 = vld [vmem:[%s391 + $0x34] sm:$0xf]
        %v498 = vld [vmem:[%s391 + $0x38] sm:$0xf]
        %v499 = vld [vmem:[%s391 + $0x3c] sm:$0xf]
        %v516 = vunpack.c.l.b16 %v484
        %v517 = vunpack.c.l.b16 %v485
        %v518 = vunpack.c.l.b16 %v486
        %v519 = vunpack.c.l.b16 %v487
        %v520 = vunpack.c.l.b16 %v488
        %v521 = vunpack.c.l.b16 %v489
        %v522 = vunpack.c.l.b16 %v490
        %v523 = vunpack.c.l.b16 %v491
        %v524 = vunpack.c.l.b16 %v492
        %v525 = vunpack.c.l.b16 %v493
        %v526 = vunpack.c.l.b16 %v494
        %v527 = vunpack.c.l.b16 %v495
        %v528 = vunpack.c.l.b16 %v496
        %v529 = vunpack.c.l.b16 %v497
        %v530 = vunpack.c.l.b16 %v498
        %v531 = vunpack.c.l.b16 %v499
        %v532 = vpack.c.b16 %v517, %v516
        %v533 = vpack.c.b16 %v519, %v518
        %v534 = vpack.c.b16 %v521, %v520
        %v535 = vpack.c.b16 %v523, %v522
        %v536 = vpack.c.b16 %v525, %v524
        %v537 = vpack.c.b16 %v527, %v526
        %v538 = vpack.c.b16 %v529, %v528
        %v539 = vpack.c.b16 %v531, %v530
        %548 = vmatprep.subr.bf16.mxu0 0
        %549 = vmatpush1.bf16.msra.mxu0 %v532
        %550 = vmatprep.subr.bf16.mxu0 0
        %551 = vmatpush1.bf16.msra.mxu0 %v533
        %552 = vmatprep.subr.bf16.mxu0 0
        %553 = vmatpush1.bf16.msra.mxu0 %v534
        %554 = vmatprep.subr.bf16.mxu0 0
        %555 = vmatpush1.bf16.msra.mxu0 %v535
        %556 = vmatprep.subr.bf16.mxu0 0
        %557 = vmatpush1.bf16.msra.mxu0 %v536
        %558 = vmatprep.subr.bf16.mxu0 0
        %559 = vmatpush1.bf16.msra.mxu0 %v537
        %560 = vmatprep.subr.bf16.mxu0 0
        %561 = vmatpush1.bf16.msra.mxu0 %v538
        %562 = vmatprep.subr.bf16.mxu0 0
        %563 = vmatpush1.bf16.msra.mxu0 %v539
        %564 = vmatprep.subr.bf16.mxu0 0
        %565 = vmatpush1.bf16.msra.mxu0 0
        %566 = vmatprep.subr.bf16.mxu0 0
        %567 = vmatpush1.bf16.msra.mxu0 0
        %568 = vmatprep.subr.bf16.mxu0 0
        %569 = vmatpush1.bf16.msra.mxu0 0
        %570 = vmatprep.subr.bf16.mxu0 0
        %571 = vmatpush1.bf16.msra.mxu0 0
        %572 = vmatprep.subr.bf16.mxu0 0
        %573 = vmatpush1.bf16.msra.mxu0 0
        %574 = vmatprep.subr.bf16.mxu0 0
        %575 = vmatpush1.bf16.msra.mxu0 0
        %576 = vmatprep.subr.bf16.mxu0 0
        %577 = vmatpush1.bf16.msra.mxu0 0
        %578 = vmatprep.subr.bf16.mxu0 0
        %579 = vmatpush1.bf16.msra.mxu0 0
        %580 = vmatprep.mubr.bf16.mxu0 0
        %581 = vmatmul.mubr.bf16.gmra.mrb[0].mxu0 %v483
        %v582 = vpop.f32.mrb[0].mxu0
        %v583 = vadd.f32 0.0, %v582
        %v584 = vpop.f32.mrb[0].mxu0
        %v585 = vpop.f32.mrb[0].mxu0
        %v586 = vpop.f32.mrb[0].mxu0
        %587 = vdwg.mxu0
        %v588 = vadd.f32 %v482, %v583
        %589 = vst [vmem:[#allocation2] sm:$0xff] %v588
        %p590 = scmp.eq.s32.totalorder %s30, 1
        // Predicated region
        $region85: #{tpu_custom_call.1} parent=51 // pred_check
          %p591 = pneg %p590
        $region86: #{tpu_custom_call.1} parent=51 // pred_check_branch
          %593 = sbr.rel (%p591) target = $region88
        $region87: #{tpu_custom_call.1} parent=51 // pred_region
          %v594 = vld [vmem:[#allocation8] sm:$0x3f]
          %v595 = vld [vmem:[%s3] sm:$0x3]
          %v596 = vld [vmem:[#allocation2] sm:$0xff]
          %v597 = vrot.slane %v596, 4
          %v598 = vadd.f32 %v596, %v597
          %v599 = vrot.slane %v598, 2
          %v600 = vadd.f32 %v598, %v599
          %v601 = vrot.slane %v600, 1
          %v602 = vadd.f32 %v600, %v601
          %v603 = vmul.f32 %v596, %v596
          %v604 = vrot.slane %v603, 4
          %v605 = vadd.f32 %v603, %v604
          %v606 = vrot.slane %v605, 2
          %v607 = vadd.f32 %v605, %v606
          %v608 = vrot.slane %v607, 1
          %v609 = vadd.f32 %v607, %v608
          %v610 = vmul.f32 %v602, 0.125
          %v611 = vmul.f32 %v609, 0.125
          %v612 = vmul.f32 %v610, %v610
          %v613 = vsub.f32 %v611, %v612
          %v614 = vmax.f32 %v613, 0.0
          %v615 = vsub.f32 %v596, %v610
          %v616 = vadd.f32 %v614, 1e-05
          %v617 = vrsqrt.pop %v616
          %v618 = vmul.f32 %v615, %v617
          %v619 = vlaneseq
          %v620 = vshrl.u32 %v619, 7
          %v621 = vsub.s32 0, %v620
          %v622 = vrot.slane %v594, %v621
          %v623 = vmul.f32 %v618, %v622
          %v624 = vlaneseq
          %v625 = vshrl.u32 %v624, 7
          %v626 = vsub.s32 1, %v625
          %v627 = vrot.slane %v594, %v626
          %v628 = vadd.f32 %v623, %v627
          %v629 = vmax.f32 %v628, 0.0
          %v630 = vpack.c.bf16 %v629, %v629
          %v631 = vld [vmem:[#allocation11] sm:$0xf]
          %v632 = vld [vmem:[#allocation11 + $0x4] sm:$0xf]
          %v633 = vld [vmem:[#allocation11 + $0x8] sm:$0xf]
          %v634 = vld [vmem:[#allocation11 + $0xc] sm:$0xf]
          %v635 = vld [vmem:[#allocation11 + $0x10] sm:$0xf]
          %v636 = vld [vmem:[#allocation11 + $0x14] sm:$0xf]
          %v637 = vld [vmem:[#allocation11 + $0x18] sm:$0xf]
          %v638 = vld [vmem:[#allocation11 + $0x1c] sm:$0xf]
          %v639 = vld [vmem:[#allocation11 + $0x20] sm:$0xf]
          %v640 = vld [vmem:[#allocation11 + $0x24] sm:$0xf]
          %v641 = vld [vmem:[#allocation11 + $0x28] sm:$0xf]
          %v642 = vld [vmem:[#allocation11 + $0x2c] sm:$0xf]
          %v643 = vld [vmem:[#allocation11 + $0x30] sm:$0xf]
          %v644 = vld [vmem:[#allocation11 + $0x34] sm:$0xf]
          %v645 = vld [vmem:[#allocation11 + $0x38] sm:$0xf]
          %v646 = vld [vmem:[#allocation11 + $0x3c] sm:$0xf]
          %v663 = vunpack.c.l.b16 %v631
          %v664 = vunpack.c.l.b16 %v632
          %v665 = vunpack.c.l.b16 %v633
          %v666 = vunpack.c.l.b16 %v634
          %v667 = vunpack.c.l.b16 %v635
          %v668 = vunpack.c.l.b16 %v636
          %v669 = vunpack.c.l.b16 %v637
          %v670 = vunpack.c.l.b16 %v638
          %v671 = vunpack.c.l.b16 %v639
          %v672 = vunpack.c.l.b16 %v640
          %v673 = vunpack.c.l.b16 %v641
          %v674 = vunpack.c.l.b16 %v642
          %v675 = vunpack.c.l.b16 %v643
          %v676 = vunpack.c.l.b16 %v644
          %v677 = vunpack.c.l.b16 %v645
          %v678 = vunpack.c.l.b16 %v646
          %v679 = vpack.c.b16 %v664, %v663
          %v680 = vpack.c.b16 %v666, %v665
          %v681 = vpack.c.b16 %v668, %v667
          %v682 = vpack.c.b16 %v670, %v669
          %v683 = vpack.c.b16 %v672, %v671
          %v684 = vpack.c.b16 %v674, %v673
          %v685 = vpack.c.b16 %v676, %v675
          %v686 = vpack.c.b16 %v678, %v677
          %695 = vmatprep.subr.bf16.mxu0 0
          %696 = vmatpush1.bf16.msra.mxu0 %v679
          %697 = vmatprep.subr.bf16.mxu0 0
          %698 = vmatpush1.bf16.msra.mxu0 %v680
          %699 = vmatprep.subr.bf16.mxu0 0
          %700 = vmatpush1.bf16.msra.mxu0 %v681
          %701 = vmatprep.subr.bf16.mxu0 0
          %702 = vmatpush1.bf16.msra.mxu0 %v682
          %703 = vmatprep.subr.bf16.mxu0 0
          %704 = vmatpush1.bf16.msra.mxu0 %v683
          %705 = vmatprep.subr.bf16.mxu0 0
          %706 = vmatpush1.bf16.msra.mxu0 %v684
          %707 = vmatprep.subr.bf16.mxu0 0
          %708 = vmatpush1.bf16.msra.mxu0 %v685
          %709 = vmatprep.subr.bf16.mxu0 0
          %710 = vmatpush1.bf16.msra.mxu0 %v686
          %711 = vmatprep.subr.bf16.mxu0 0
          %712 = vmatpush1.bf16.msra.mxu0 0
          %713 = vmatprep.subr.bf16.mxu0 0
          %714 = vmatpush1.bf16.msra.mxu0 0
          %715 = vmatprep.subr.bf16.mxu0 0
          %716 = vmatpush1.bf16.msra.mxu0 0
          %717 = vmatprep.subr.bf16.mxu0 0
          %718 = vmatpush1.bf16.msra.mxu0 0
          %719 = vmatprep.subr.bf16.mxu0 0
          %720 = vmatpush1.bf16.msra.mxu0 0
          %721 = vmatprep.subr.bf16.mxu0 0
          %722 = vmatpush1.bf16.msra.mxu0 0
          %723 = vmatprep.subr.bf16.mxu0 0
          %724 = vmatpush1.bf16.msra.mxu0 0
          %725 = vmatprep.subr.bf16.mxu0 0
          %726 = vmatpush1.bf16.msra.mxu0 0
          %727 = vmatprep.mubr.bf16.mxu0 0
          %728 = vmatmul.mubr.bf16.gmra.mrb[0].mxu0 %v630
          %v729 = vpop.f32.mrb[0].mxu0
          %v730 = vadd.f32 0.0, %v729
          %v731 = vpop.f32.mrb[0].mxu0
          %v732 = vpop.f32.mrb[0].mxu0
          %v733 = vpop.f32.mrb[0].mxu0
          %734 = vdwg.mxu0
          %v735 = vrot.slane %v730, 4
          %v736 = vadd.f32 %v730, %v735
          %v737 = vrot.slane %v736, 2
          %v738 = vadd.f32 %v736, %v737
          %v739 = vrot.slane %v738, 1
          %v740 = vadd.f32 %v738, %v739
          %v741 = vmul.f32 %v730, %v730
          %v742 = vrot.slane %v741, 4
          %v743 = vadd.f32 %v741, %v742
          %v744 = vrot.slane %v743, 2
          %v745 = vadd.f32 %v743, %v744
          %v746 = vrot.slane %v745, 1
          %v747 = vadd.f32 %v745, %v746
          %v748 = vmul.f32 %v740, 0.125
          %v749 = vmul.f32 %v747, 0.125
          %v750 = vmul.f32 %v748, %v748
          %v751 = vsub.f32 %v749, %v750
          %v752 = vmax.f32 %v751, 0.0
          %v753 = vsub.f32 %v730, %v748
          %v754 = vadd.f32 %v752, 1e-05
          %v755 = vrsqrt.pop %v754
          %v756 = vmul.f32 %v753, %v755
          %v757 = vlaneseq
          %v758 = vshrl.u32 %v757, 7
          %v759 = vsub.s32 2, %v758
          %v760 = vrot.slane %v594, %v759
          %v761 = vmul.f32 %v756, %v760
          %v762 = vlaneseq
          %v763 = vshrl.u32 %v762, 7
          %v764 = vsub.s32 3, %v763
          %v765 = vrot.slane %v594, %v764
          %v766 = vadd.f32 %v761, %v765
          %v767 = vmax.f32 %v766, 0.0
          %v768 = vpack.c.bf16 %v767, %v767
          %v769 = vld [vmem:[#allocation12] sm:$0xf]
          %v770 = vld [vmem:[#allocation12 + $0x4] sm:$0xf]
          %v771 = vld [vmem:[#allocation12 + $0x8] sm:$0xf]
          %v772 = vld [vmem:[#allocation12 + $0xc] sm:$0xf]
          %v773 = vld [vmem:[#allocation12 + $0x10] sm:$0xf]
          %v774 = vld [vmem:[#allocation12 + $0x14] sm:$0xf]
          %v775 = vld [vmem:[#allocation12 + $0x18] sm:$0xf]
          %v776 = vld [vmem:[#allocation12 + $0x1c] sm:$0xf]
          %v777 = vld [vmem:[#allocation12 + $0x20] sm:$0xf]
          %v778 = vld [vmem:[#allocation12 + $0x24] sm:$0xf]
          %v779 = vld [vmem:[#allocation12 + $0x28] sm:$0xf]
          %v780 = vld [vmem:[#allocation12 + $0x2c] sm:$0xf]
          %v781 = vld [vmem:[#allocation12 + $0x30] sm:$0xf]
          %v782 = vld [vmem:[#allocation12 + $0x34] sm:$0xf]
          %v783 = vld [vmem:[#allocation12 + $0x38] sm:$0xf]
          %v784 = vld [vmem:[#allocation12 + $0x3c] sm:$0xf]
          %v801 = vunpack.c.l.b16 %v769
          %v802 = vunpack.c.l.b16 %v770
          %v803 = vunpack.c.l.b16 %v771
          %v804 = vunpack.c.l.b16 %v772
          %v805 = vunpack.c.l.b16 %v773
          %v806 = vunpack.c.l.b16 %v774
          %v807 = vunpack.c.l.b16 %v775
          %v808 = vunpack.c.l.b16 %v776
          %v809 = vunpack.c.l.b16 %v777
          %v810 = vunpack.c.l.b16 %v778
          %v811 = vunpack.c.l.b16 %v779
          %v812 = vunpack.c.l.b16 %v780
          %v813 = vunpack.c.l.b16 %v781
          %v814 = vunpack.c.l.b16 %v782
          %v815 = vunpack.c.l.b16 %v783
          %v816 = vunpack.c.l.b16 %v784
          %v817 = vpack.c.b16 %v802, %v801
          %v818 = vpack.c.b16 %v804, %v803
          %v819 = vpack.c.b16 %v806, %v805
          %v820 = vpack.c.b16 %v808, %v807
          %v821 = vpack.c.b16 %v810, %v809
          %v822 = vpack.c.b16 %v812, %v811
          %v823 = vpack.c.b16 %v814, %v813
          %v824 = vpack.c.b16 %v816, %v815
          %833 = vmatprep.subr.bf16.mxu0 0
          %834 = vmatpush1.bf16.msra.mxu0 %v817
          %835 = vmatprep.subr.bf16.mxu0 0
          %836 = vmatpush1.bf16.msra.mxu0 %v818
          %837 = vmatprep.subr.bf16.mxu0 0
          %838 = vmatpush1.bf16.msra.mxu0 %v819
          %839 = vmatprep.subr.bf16.mxu0 0
          %840 = vmatpush1.bf16.msra.mxu0 %v820
          %841 = vmatprep.subr.bf16.mxu0 0
          %842 = vmatpush1.bf16.msra.mxu0 %v821
          %843 = vmatprep.subr.bf16.mxu0 0
          %844 = vmatpush1.bf16.msra.mxu0 %v822
          %845 = vmatprep.subr.bf16.mxu0 0
          %846 = vmatpush1.bf16.msra.mxu0 %v823
          %847 = vmatprep.subr.bf16.mxu0 0
          %848 = vmatpush1.bf16.msra.mxu0 %v824
          %849 = vmatprep.subr.bf16.mxu0 0
          %850 = vmatpush1.bf16.msra.mxu0 0
          %851 = vmatprep.subr.bf16.mxu0 0
          %852 = vmatpush1.bf16.msra.mxu0 0
          %853 = vmatprep.subr.bf16.mxu0 0
          %854 = vmatpush1.bf16.msra.mxu0 0
          %855 = vmatprep.subr.bf16.mxu0 0
          %856 = vmatpush1.bf16.msra.mxu0 0
          %857 = vmatprep.subr.bf16.mxu0 0
          %858 = vmatpush1.bf16.msra.mxu0 0
          %859 = vmatprep.subr.bf16.mxu0 0
          %860 = vmatpush1.bf16.msra.mxu0 0
          %861 = vmatprep.subr.bf16.mxu0 0
          %862 = vmatpush1.bf16.msra.mxu0 0
          %863 = vmatprep.subr.bf16.mxu0 0
          %864 = vmatpush1.bf16.msra.mxu0 0
          %865 = vmatprep.mubr.bf16.mxu0 0
          %866 = vmatmul.mubr.bf16.gmra.mrb[0].mxu0 %v768
          %v867 = vpop.f32.mrb[0].mxu0
          %v868 = vadd.f32 0.0, %v867
          %v869 = vpop.f32.mrb[0].mxu0
          %v870 = vpop.f32.mrb[0].mxu0
          %v871 = vpop.f32.mrb[0].mxu0
          %872 = vdwg.mxu0
          %v873 = vrot.slane %v868, 4
          %v874 = vadd.f32 %v868, %v873
          %v875 = vrot.slane %v874, 2
          %v876 = vadd.f32 %v874, %v875
          %v877 = vrot.slane %v876, 1
          %v878 = vadd.f32 %v876, %v877
          %v879 = vmul.f32 %v868, %v868
          %v880 = vrot.slane %v879, 4
          %v881 = vadd.f32 %v879, %v880
          %v882 = vrot.slane %v881, 2
          %v883 = vadd.f32 %v881, %v882
          %v884 = vrot.slane %v883, 1
          %v885 = vadd.f32 %v883, %v884
          %v886 = vmul.f32 %v878, 0.125
          %v887 = vmul.f32 %v885, 0.125
          %v888 = vmul.f32 %v886, %v886
          %v889 = vsub.f32 %v887, %v888
          %v890 = vmax.f32 %v889, 0.0
          %v891 = vsub.f32 %v868, %v886
          %v892 = vadd.f32 %v890, 1e-05
          %v893 = vrsqrt.pop %v892
          %v894 = vmul.f32 %v891, %v893
          %v895 = vlaneseq
          %v896 = vshrl.u32 %v895, 7
          %v897 = vsub.s32 4, %v896
          %v898 = vrot.slane %v594, %v897
          %v899 = vmul.f32 %v894, %v898
          %v900 = vlaneseq
          %v901 = vshrl.u32 %v900, 7
          %v902 = vsub.s32 5, %v901
          %v903 = vrot.slane %v594, %v902
          %v904 = vadd.f32 %v899, %v903
          %v905 = vmax.f32 %v904, 0.0
          %v906 = vpack.c.bf16 %v905, %v905
          %v907 = vld [vmem:[#allocation14] sm:$0xf]
          %v908 = vld [vmem:[#allocation14 + $0x4] sm:$0xf]
          %v909 = vld [vmem:[#allocation14 + $0x8] sm:$0xf]
          %v910 = vld [vmem:[#allocation14 + $0xc] sm:$0xf]
          %v911 = vld [vmem:[#allocation14 + $0x10] sm:$0xf]
          %v912 = vld [vmem:[#allocation14 + $0x14] sm:$0xf]
          %v913 = vld [vmem:[#allocation14 + $0x18] sm:$0xf]
          %v914 = vld [vmem:[#allocation14 + $0x1c] sm:$0xf]
          %v915 = vld [vmem:[#allocation14 + $0x20] sm:$0xf]
          %v916 = vld [vmem:[#allocation14 + $0x24] sm:$0xf]
          %v917 = vld [vmem:[#allocation14 + $0x28] sm:$0xf]
          %v918 = vld [vmem:[#allocation14 + $0x2c] sm:$0xf]
          %v919 = vld [vmem:[#allocation14 + $0x30] sm:$0xf]
          %v920 = vld [vmem:[#allocation14 + $0x34] sm:$0xf]
          %v921 = vld [vmem:[#allocation14 + $0x38] sm:$0xf]
          %v922 = vld [vmem:[#allocation14 + $0x3c] sm:$0xf]
          %v939 = vunpack.c.l.b16 %v907
          %v940 = vunpack.c.l.b16 %v908
          %v941 = vunpack.c.l.b16 %v909
          %v942 = vunpack.c.l.b16 %v910
          %v943 = vunpack.c.l.b16 %v911
          %v944 = vunpack.c.l.b16 %v912
          %v945 = vunpack.c.l.b16 %v913
          %v946 = vunpack.c.l.b16 %v914
          %v947 = vunpack.c.l.b16 %v915
          %v948 = vunpack.c.l.b16 %v916
          %v949 = vunpack.c.l.b16 %v917
          %v950 = vunpack.c.l.b16 %v918
          %v951 = vunpack.c.l.b16 %v919
          %v952 = vunpack.c.l.b16 %v920
          %v953 = vunpack.c.l.b16 %v921
          %v954 = vunpack.c.l.b16 %v922
          %v955 = vpack.c.b16 %v940, %v939
          %v956 = vpack.c.b16 %v942, %v941
          %v957 = vpack.c.b16 %v944, %v943
          %v958 = vpack.c.b16 %v946, %v945
          %v959 = vpack.c.b16 %v948, %v947
          %v960 = vpack.c.b16 %v950, %v949
          %v961 = vpack.c.b16 %v952, %v951
          %v962 = vpack.c.b16 %v954, %v953
          %971 = vmatprep.subr.bf16.mxu0 0
          %972 = vmatpush1.bf16.msra.mxu0 %v955
          %973 = vmatprep.subr.bf16.mxu0 0
          %974 = vmatpush1.bf16.msra.mxu0 %v956
          %975 = vmatprep.subr.bf16.mxu0 0
          %976 = vmatpush1.bf16.msra.mxu0 %v957
          %977 = vmatprep.subr.bf16.mxu0 0
          %978 = vmatpush1.bf16.msra.mxu0 %v958
          %979 = vmatprep.subr.bf16.mxu0 0
          %980 = vmatpush1.bf16.msra.mxu0 %v959
          %981 = vmatprep.subr.bf16.mxu0 0
          %982 = vmatpush1.bf16.msra.mxu0 %v960
          %983 = vmatprep.subr.bf16.mxu0 0
          %984 = vmatpush1.bf16.msra.mxu0 %v961
          %985 = vmatprep.subr.bf16.mxu0 0
          %986 = vmatpush1.bf16.msra.mxu0 %v962
          %987 = vmatprep.subr.bf16.mxu0 0
          %988 = vmatpush1.bf16.msra.mxu0 0
          %989 = vmatprep.subr.bf16.mxu0 0
          %990 = vmatpush1.bf16.msra.mxu0 0
          %991 = vmatprep.subr.bf16.mxu0 0
          %992 = vmatpush1.bf16.msra.mxu0 0
          %993 = vmatprep.subr.bf16.mxu0 0
          %994 = vmatpush1.bf16.msra.mxu0 0
          %995 = vmatprep.subr.bf16.mxu0 0
          %996 = vmatpush1.bf16.msra.mxu0 0
          %997 = vmatprep.subr.bf16.mxu0 0
          %998 = vmatpush1.bf16.msra.mxu0 0
          %999 = vmatprep.subr.bf16.mxu0 0
          %1000 = vmatpush1.bf16.msra.mxu0 0
          %1001 = vmatprep.subr.bf16.mxu0 0
          %1002 = vmatpush1.bf16.msra.mxu0 0
          %1003 = vmatprep.mubr.bf16.mxu0 0
          %1004 = vmatmul.mubr.bf16.gmra.mrb[0].mxu0 %v906
          %v1005 = vpop.f32.mrb[0].mxu0
          %v1006 = vadd.f32 0.0, %v1005
          %v1007 = vpop.f32.mrb[0].mxu0
          %v1008 = vpop.f32.mrb[0].mxu0
          %v1009 = vpop.f32.mrb[0].mxu0
          %1010 = vdwg.mxu0
          %v1011 = vrot.slane %v1006, 4
          %v1012 = vadd.f32 %v1006, %v1011
          %v1013 = vrot.slane %v1012, 2
          %v1014 = vadd.f32 %v1012, %v1013
          %v1015 = vrot.slane %v1014, 1
          %v1016 = vadd.f32 %v1014, %v1015
          %v1017 = vmul.f32 %v1006, %v1006
          %v1018 = vrot.slane %v1017, 4
          %v1019 = vadd.f32 %v1017, %v1018
          %v1020 = vrot.slane %v1019, 2
          %v1021 = vadd.f32 %v1019, %v1020
          %v1022 = vrot.slane %v1021, 1
          %v1023 = vadd.f32 %v1021, %v1022
          %v1024 = vmul.f32 %v1016, 0.125
          %v1025 = vmul.f32 %v1023, 0.125
          %v1026 = vmul.f32 %v1024, %v1024
          %v1027 = vsub.f32 %v1025, %v1026
          %v1028 = vmax.f32 %v1027, 0.0
          %v1029 = vsub.f32 %v1006, %v1024
          %v1030 = vadd.f32 %v1028, 1e-05
          %v1031 = vrsqrt.pop %v1030
          %v1032 = vmul.f32 %v1029, %v1031
          %v1033 = vlaneseq
          %v1034 = vshrl.u32 %v1033, 7
          %v1035 = vsub.s32 0, %v1034
          %v1036 = vrot.slane %v595, %v1035
          %v1037 = vmul.f32 %v1032, %v1036
          %v1038 = vlaneseq
          %v1039 = vshrl.u32 %v1038, 7
          %v1040 = vsub.s32 1, %v1039
          %v1041 = vrot.slane %v595, %v1040
          %v1042 = vadd.f32 %v1037, %v1041
          %1043 = vst [vmem:[#allocation15] sm:$0xff] %v1042
        $region88: #{tpu_custom_call.1} parent=51 // pred_fallthru
          _
        // Predicated region
        $region89: #{tpu_custom_call.1} parent=51 // pred_check
          %p1044 = pneg %p226
        $region90: #{tpu_custom_call.1} parent=51 // pred_check_branch
          %1046 = sbr.rel (%p1044) target = $region92
        $region91: #{tpu_custom_call.1} parent=51 // pred_region
          %s1048 = ssub.s32 128, 128
          %1049 = vsyncadd [#allocation5], %s1048
          %s1051 = sshll.u32 [#allocation15], 4
          %s1052 = int_to_ptr.vmem [resolvable:$true] %s1051
          %1054 = dma.vmem_to_hbm [thread:$0]  %s1052, 128, %s8, [#allocation5]
        $region92: #{tpu_custom_call.1} parent=51 // pred_fallthru
          _
        // Predicated region
        $region93: #{tpu_custom_call.1} parent=51 // pred_check
          %p1055 = pneg %p226
        $region94: #{tpu_custom_call.1} parent=51 // pred_check_branch
          %1057 = sbr.rel (%p1055) target = $region96
        $region95: #{tpu_custom_call.1} parent=51 // pred_region
          %1058 = dma.done [#allocation5], 128
        $region96: #{tpu_custom_call.1} parent=51 // pred_fallthru
          _
      $region52: #{tpu_custom_call.1} parent=5 // pred_fallthru
        _
      %p1059 = scmp.le.s32.totalorder 2, %s25
      // Predicated region
      $region97: #{tpu_custom_call.1} parent=5 // pred_check
        %p1060 = pneg %p1059
      $region98: #{tpu_custom_call.1} parent=5 // pred_check_branch
        %1062 = sbr.rel (%p1060) target = $region100
      $region99: #{tpu_custom_call.1} parent=5 // pred_region
        %s1063 = ssub.s32 %s25, 2
      $region100: #{tpu_custom_call.1} parent=5 // pred_fallthru
        _
    $region6: #{tpu_custom_call.1} parent=1 // loop_footer
      %s29 = sadd.s32 1, %s25
    $region7: #{tpu_custom_call.1} parent=1 // loop_footer_branch
      %24 = sbr.rel target = $region3
    $region8: #{tpu_custom_call.1} parent=1 // loop_exit
      _
    %1064 = vsyncpa [#allocation4], 1
    %s1065 = scalar_lea.sflag [#allocation4], 1
    %1066 = vsyncpa %s1065, 1
    %1067 = vsyncpa [#allocation7], 1
    %s1068 = scalar_lea.sflag [#allocation7], 1
    %1069 = vsyncpa %s1068, 1
    %1070 = vsyncpa [#allocation10], 1
    %s1071 = scalar_lea.sflag [#allocation10], 1
    %1072 = vsyncpa %s1071, 1
    %1073 = vsyncpa [#allocation13], 1
    %1074 = vsyncpa [#allocation5], 1
    %s1075 = scalar_lea.sflag [#allocation5], 1
    %1076 = vsyncpa %s1075, 1

</llo_original>
